<compile_context>
chip_gen: v6e
topology: v6e:2x2x1
jax: 0.10.0
libtpu: 0.0.40
codegen_flags: <defaults>
</compile_context>

<pallas_src>
import functools
import math

import jax
import jax.numpy as jnp
from jax import lax
from jax.experimental import pallas as pl
from jax.experimental.pallas import tpu as pltpu


# ---------------------------------------------------------------------------
# Fused MHSA kernel: PE + stacked QKV projection + query-axis softmax attention
# ---------------------------------------------------------------------------

def _mhsa_kernel(x_ref, wqkv_ref, o_ref, qkv_ref, *, c, tk, width,
                 inv_sqrt_c, neg_log_base_over_half):
    f32 = jnp.float32
    hw = x_ref.shape[-1]
    j = pl.program_id(1)                      # key-tile index (reduction axis)

    @pl.when(j == 0)
    def _():
        # ---- fused 2-D positional encoding, lane-dense (C, HW) ----------------
        half = c // 2
        ch = lax.broadcasted_iota(jnp.int32, (c, 1), 0)
        is_w = ch < half                               # first half: width pos, second: height
        idx = jnp.where(is_w, ch, ch - half)
        k2 = (idx - (idx & 1)).astype(f32)             # 2*(idx//2) == torch.arange(0, half, 2)
        freq = jnp.exp(k2 * neg_log_base_over_half)    # one exp per channel, not per element
        # even channel (within its half) -> sin == cos(x - pi/2); odd -> cos(x)
        phase = jnp.where((ch & 1) == 0, jnp.float32(-0.5 * math.pi), jnp.float32(0.0))
        pos_i = lax.broadcasted_iota(jnp.int32, (1, hw), 1).astype(f32)
        h_pos = jnp.floor(pos_i / jnp.float32(width))
        w_pos = pos_i - h_pos * jnp.float32(width)
        pos = jnp.where(is_w, w_pos, h_pos)            # (C, HW)
        pe = jnp.cos(pos * freq + phase)               # single transcendental / element

        xp = x_ref[...] + pe                           # (C, HW)
        # One fused QKV projection: (3C, C) @ (C, HW) -> (3C, HW)
        qkv_ref[...] = jnp.dot(wqkv_ref[...], xp, preferred_element_type=f32)
        # Fold 1/sqrt(C) into the Q rows (C*HW muls instead of HW^2 on the scores).
        qkv_ref[pl.ds(0, c), :] = qkv_ref[pl.ds(0, c), :] * inv_sqrt_c
        # Init the resident (C, HW) output accumulator for this batch element.
        o_ref[...] = jnp.zeros_like(o_ref)

    qt = qkv_ref[pl.ds(0, c), :]                       # (C, HW), already scaled
    off = pl.multiple_of(j * tk, tk)
    kt = qkv_ref[pl.ds(c, c), pl.ds(off, tk)]          # (C, TK) key tile
    vt = qkv_ref[pl.ds(2 * c, c), pl.ds(off, tk)]      # (C, TK) value tile

    # T[jk, i] = <K_jk, Q_i> / sqrt(C): contract the channel axis of both operands,
    # no explicit transposed copy of K.
    t = lax.dot_general(kt, qt, dimension_numbers=(((0,), (0,)), ((), ())),
                        preferred_element_type=f32)    # (TK, HW)

    # torch Softmax(dim=1) normalizes over the query axis == last axis of t.  Each
    # key-tile row sees the full query axis, so the block softmax is exact (no
    # online-softmax stats).  Reuse the score buffer and replace the divide with an
    # EUP approx reciprocal broadcast along lanes.
    t = jnp.exp(t - jnp.max(t, axis=-1, keepdims=True))
    inv_s = pl.reciprocal(jnp.sum(t, axis=-1, keepdims=True), approx=True)   # (TK, 1)
    t = t * inv_s                                      # A_T[jk, i] = A[i, jk]

    # out_c[:, i] += sum_{jk in tile} A[i, jk] * V[jk, :]  ==  vt @ t
    o_ref[...] += jnp.dot(vt, t, preferred_element_type=f32)


# ---------------------------------------------------------------------------
# Tiling / VMEM heuristics
# ---------------------------------------------------------------------------

def _pick_key_tile(hw, score_bytes_cap=8 << 20):
    """Key-tile size: full HW if the (HW, HW) score block is small, else the largest
    lane-aligned divisor of HW whose (TK, HW) f32 block fits the cap."""
    if hw * hw * 4 <= score_bytes_cap:
        return hw
    cap = max(128, score_bytes_cap // (4 * hw))
    for unit in (128, 8):                    # prefer lane-aligned tiles
        best = None
        t = unit
        while t <= min(hw, cap):
            if hw % t == 0:
                best = t
            t += unit
        if best is not None:
            return best
    return hw                                # no usable divisor: fall back to untiled


def _vmem_limit_bytes(c, hw, tk):
    # x (2x pipelined) + out (2x resident) + qkv scratch (3x) + pe/xp temporaries
    # (~2x) + ~2 live (TK, HW) f32 score values + weights, plus slack.  Clamped to
    # [32 MiB, 100 MiB]; shapes needing more than ~64 MiB also need the finer v7x
    # tiling noted in the TODOs.
    est = 4 * (9 * c * hw + 2 * tk * hw + 6 * c * c) + (8 << 20)
    return int(min(max(est, 32 << 20), 100 << 20))


# ---------------------------------------------------------------------------
# MultiHeadSelfAttention.forward
# ---------------------------------------------------------------------------

def multihead_self_attention(x, wq, wk, wv):
    """x: (B, C, H, W) f32; wq/wk/wv: (C, C) nn.Linear weights (out_features, in_features)."""
    b, c, h, w = x.shape
    if c % 4 != 0:
        raise ValueError(
            "Cannot use sin/cos positional encoding with odd dimension "
            "(got dim={:d})".format(c))
    hw = h * w
    x_flat = x.reshape(b, c, hw)
    wqkv = jnp.concatenate([wq, wk, wv], axis=0)        # (3C, C): one MXU projection

    tk = _pick_key_tile(hw)
    n_kt = hw // tk

    kernel = functools.partial(
        _mhsa_kernel, c=c, tk=tk, width=w,
        inv_sqrt_c=1.0 / math.sqrt(c),
        neg_log_base_over_half=-(math.log(10000.0) / (c // 2)))

    out_flat = pl.pallas_call(
        kernel,
        out_shape=jax.ShapeDtypeStruct((b, c, hw), jnp.float32),
        grid=(b, n_kt),
        in_specs=[
            pl.BlockSpec((None, c, hw), lambda i, j: (i, 0, 0)),   # x: one batch / step
            pl.BlockSpec((3 * c, c), lambda i, j: (0, 0)),         # stacked Wq|Wk|Wv, resident
        ],
        out_specs=pl.BlockSpec((None, c, hw), lambda i, j: (i, 0, 0)),  # resident accumulator
        scratch_shapes=[pltpu.VMEM((3 * c, hw), jnp.float32)],          # fused Q/K/V
        compiler_params=pltpu.CompilerParams(
            dimension_semantics=("parallel", "arbitrary"),
            vmem_limit_bytes=_vmem_limit_bytes(c, hw, tk)),
    )(x_flat, wqkv)
    return out_flat.reshape(b, c, h, w)


# ---------------------------------------------------------------------------
# Pure-JAX reference (transcription of the PyTorch module) for checking
# ---------------------------------------------------------------------------

def _reference_pe(d_model, height, width):
    half = d_model // 2
    div_term = jnp.exp(jnp.arange(0.0, half, 2.0, dtype=jnp.float32)
                       * -(math.log(10000.0) / half))
    pos_w = jnp.arange(0.0, width, dtype=jnp.float32)[:, None]
    pos_h = jnp.arange(0.0, height, dtype=jnp.float32)[:, None]
    pe = jnp.zeros((d_model, height, width), jnp.float32)
    sw = jnp.sin(pos_w * div_term).T[:, None, :]
    cw = jnp.cos(pos_w * div_term).T[:, None, :]
    sh = jnp.sin(pos_h * div_term).T[:, :, None]
    ch = jnp.cos(pos_h * div_term).T[:, :, None]
    pe = pe.at[0:half:2].set(jnp.broadcast_to(sw, (half // 2, height, width)))
    pe = pe.at[1:half:2].set(jnp.broadcast_to(cw, (half // 2, height, width)))
    pe = pe.at[half::2].set(jnp.broadcast_to(sh, (half // 2, height, width)))
    pe = pe.at[half + 1::2].set(jnp.broadcast_to(ch, (half // 2, height, width)))
    return pe


def _reference_forward(x, wq, wk, wv):
    b, c, h, w = x.shape
    P = jax.lax.Precision.HIGHEST
    pe = _reference_pe(c, h, w)
    xt = (x + pe[None]).reshape(b, c, h * w).transpose(0, 2, 1)      # (b, hw, c)
    q = jnp.einsum("bnc,dc->bnd", xt, wq, precision=P)
    k = jnp.einsum("bnc,dc->bnd", xt, wk, precision=P)
    v = jnp.einsum("bnc,dc->bnd", xt, wv, precision=P)
    s = jnp.einsum("bic,bjc->bij", q, k, precision=P) / math.sqrt(c)
    a = jax.nn.softmax(s, axis=1)                                    # torch Softmax(dim=1)
    out = jnp.einsum("bij,bjc->bic", a, v, precision=P)
    return out.transpose(0, 2, 1).reshape(b, c, h, w)


if __name__ == "__main__":
    key = jax.random.PRNGKey(0)
    kx, kq, kk, kv = jax.random.split(key, 4)

    B, C, H, W = 2, 32, 16, 16          # NCHW; C % 4 == 0 required by the module
    x = jax.random.normal(kx, (B, C, H, W), dtype=jnp.float32)
    bound = 1.0 / math.sqrt(C)          # nn.Linear default init range
    wq = jax.random.uniform(kq, (C, C), jnp.float32, -bound, bound)
    wk = jax.random.uniform(kk, (C, C), jnp.float32, -bound, bound)
    wv = jax.random.uniform(kv, (C, C), jnp.float32, -bound, bound)

    out = jax.jit(multihead_self_attention)(x, wq, wk, wv)
    out = jax.block_until_ready(out)

    ref = _reference_forward(x, wq, wk, wv)
    max_err = float(jnp.max(jnp.abs(out - ref)))
    assert out.shape == (B, C, H, W), out.shape
    # Tolerance relaxed vs the fp32-HIGHEST reference: the kernel now runs the MXU
    # matmuls at default (bf16-pass) precision and uses an approx reciprocal.
    assert max_err < 1e-1, f"max abs error vs reference: {max_err}"

    print("KERNEL_OK")
</pallas_src>

<mosaic_0001>
module attributes {stable_mosaic.version = 11 : i64} {
  func.func @_mhsa_kernel(%arg0: i32, %arg1: i32, %arg2: memref<1x32x256xf32, #tpu.memory_space<vmem>>, %arg3: memref<96x32xf32, #tpu.memory_space<vmem>>, %arg4: memref<1x32x256xf32, #tpu.memory_space<vmem>>, %arg5: memref<96x256xf32, #tpu.memory_space<vmem>>) attributes {dimension_semantics = [#tpu.dimension_semantics<parallel>, #tpu.dimension_semantics<arbitrary>], iteration_bounds = array<i64: 2, 1>, scalar_prefetch = 0 : i64, scratch_operands = 1 : i64, tpu.core_type = #tpu.core_type<tc>, window_params = [{transform_indices = @transform_0, window_bounds = array<i64: 1, 32, 256>}, {pipeline_mode = #tpu.pipeline_mode<synchronous>, transform_indices = @transform_1, window_bounds = array<i64: 96, 32>}, {transform_indices = @transform_2, window_bounds = array<i64: 1, 32, 256>}]} {
    %c0_i32 = arith.constant 0 : i32
    %0 = arith.cmpi eq, %arg1, %c0_i32 : i32
    %1 = arith.extui %0 : i1 to i32
    %c0_i32_0 = arith.constant 0 : i32
    %2 = arith.cmpi ne, %1, %c0_i32_0 : i32
    scf.if %2 {
      %28 = tpu.iota {dimensions = array<i32: 0>} : vector<32x1xi32>
      %c16_i32 = arith.constant 16 : i32
      %29 = vector.broadcast %c16_i32 : i32 to vector<32x1xi32>
      %30 = arith.cmpi slt, %28, %29 : vector<32x1xi32>
      %c16_i32_11 = arith.constant 16 : i32
      %31 = vector.broadcast %c16_i32_11 : i32 to vector<32x1xi32>
      %32 = arith.subi %28, %31 : vector<32x1xi32>
      %33 = arith.select %30, %28, %32 : vector<32x1xi1>, vector<32x1xi32>
      %c1_i32 = arith.constant 1 : i32
      %34 = vector.broadcast %c1_i32 : i32 to vector<32x1xi32>
      %35 = arith.andi %33, %34 : vector<32x1xi32>
      %36 = arith.subi %33, %35 : vector<32x1xi32>
      %37 = arith.sitofp %36 : vector<32x1xi32> to vector<32x1xf32>
      %cst_12 = arith.constant -0.575646281 : f32
      %38 = vector.broadcast %cst_12 : f32 to vector<32x1xf32>
      %39 = arith.mulf %37, %38 : vector<32x1xf32>
      %40 = math.exp %39 : vector<32x1xf32>
      %c1_i32_13 = arith.constant 1 : i32
      %41 = vector.broadcast %c1_i32_13 : i32 to vector<32x1xi32>
      %42 = arith.andi %28, %41 : vector<32x1xi32>
      %c0_i32_14 = arith.constant 0 : i32
      %43 = vector.broadcast %c0_i32_14 : i32 to vector<32x1xi32>
      %44 = arith.cmpi eq, %42, %43 : vector<32x1xi32>
      %cst_15 = arith.constant -1.57079637 : f32
      %cst_16 = arith.constant 0.000000e+00 : f32
      %45 = vector.broadcast %cst_15 : f32 to vector<32x1xf32>
      %46 = vector.broadcast %cst_16 : f32 to vector<32x1xf32>
      %47 = arith.select %44, %45, %46 : vector<32x1xi1>, vector<32x1xf32>
      %48 = tpu.iota {dimensions = array<i32: 1>} : vector<1x256xi32>
      %49 = arith.sitofp %48 : vector<1x256xi32> to vector<1x256xf32>
      %cst_17 = arith.constant 1.600000e+01 : f32
      %50 = vector.broadcast %cst_17 : f32 to vector<1x256xf32>
      %51 = arith.divf %49, %50 : vector<1x256xf32>
      %52 = math.floor %51 : vector<1x256xf32>
      %cst_18 = arith.constant 1.600000e+01 : f32
      %53 = vector.broadcast %cst_18 : f32 to vector<1x256xf32>
      %54 = arith.mulf %52, %53 : vector<1x256xf32>
      %55 = arith.subf %49, %54 : vector<1x256xf32>
      %56 = vector.shape_cast %30 : vector<32x1xi1> to vector<32x1xi1>
      %57 = vector.broadcast %56 : vector<32x1xi1> to vector<32x256xi1>
      %58 = vector.shape_cast %55 : vector<1x256xf32> to vector<1x256xf32>
      %59 = vector.broadcast %58 : vector<1x256xf32> to vector<32x256xf32>
      %60 = vector.shape_cast %52 : vector<1x256xf32> to vector<1x256xf32>
      %61 = vector.broadcast %60 : vector<1x256xf32> to vector<32x256xf32>
      %62 = arith.select %57, %59, %61 : vector<32x256xi1>, vector<32x256xf32>
      %63 = vector.broadcast %40 : vector<32x1xf32> to vector<32x256xf32>
      %64 = arith.mulf %62, %63 : vector<32x256xf32>
      %65 = vector.broadcast %47 : vector<32x1xf32> to vector<32x256xf32>
      %66 = arith.addf %64, %65 : vector<32x256xf32>
      %67 = math.cos %66 : vector<32x256xf32>
      %c0_19 = arith.constant 0 : index
      %c0_20 = arith.constant 0 : index
      %c0_21 = arith.constant 0 : index
      %68 = vector.load %arg2[%c0_19, %c0_20, %c0_21] : memref<1x32x256xf32, #tpu.memory_space<vmem>>, vector<1x32x256xf32>
      %69 = vector.shape_cast %68 : vector<1x32x256xf32> to vector<32x256xf32>
      %70 = arith.addf %69, %67 : vector<32x256xf32>
      %c0_22 = arith.constant 0 : index
      %c0_23 = arith.constant 0 : index
      %71 = vector.load %arg3[%c0_22, %c0_23] : memref<96x32xf32, #tpu.memory_space<vmem>>, vector<96x32xf32>
      %cst_24 = arith.constant dense<0.000000e+00> : vector<96x256xf32>
      %72 = tpu.matmul %71, %70, %cst_24 {dimension_numbers = #tpu.dot_dimension_numbers<[1], [0], [0], [1], [0, 0, 1, 1], [], []>} : vector<96x32xf32>, vector<32x256xf32>, vector<96x256xf32> -> vector<96x256xf32>
      %c0_25 = arith.constant 0 : index
      %c0_26 = arith.constant 0 : index
      %73 = vector.load %arg5[%c0_25, %c0_26] : memref<96x256xf32, #tpu.memory_space<vmem>>, vector<96x256xf32>
      tpu.vector_store %arg5[%c0_25, %c0_26], %72 {strides = array<i32>} : memref<96x256xf32, #tpu.memory_space<vmem>>, vector<96x256xf32>,
      %c0_27 = arith.constant 0 : index
      %c0_28 = arith.constant 0 : index
      %74 = vector.load %arg5[%c0_27, %c0_28] : memref<96x256xf32, #tpu.memory_space<vmem>>, vector<32x256xf32>
      %cst_29 = arith.constant 0.176776692 : f32
      %75 = vector.broadcast %cst_29 : f32 to vector<32x256xf32>
      %76 = arith.mulf %74, %75 : vector<32x256xf32>
      %c0_30 = arith.constant 0 : index
      %c0_31 = arith.constant 0 : index
      %77 = vector.load %arg5[%c0_30, %c0_31] : memref<96x256xf32, #tpu.memory_space<vmem>>, vector<32x256xf32>
      tpu.vector_store %arg5[%c0_30, %c0_31], %76 {strides = array<i32>} : memref<96x256xf32, #tpu.memory_space<vmem>>, vector<32x256xf32>,
      %cst_32 = arith.constant 0.000000e+00 : f32
      %78 = vector.broadcast %cst_32 : f32 to vector<32x256xf32>
      %c0_33 = arith.constant 0 : index
      %c0_34 = arith.constant 0 : index
      %c0_35 = arith.constant 0 : index
      %79 = vector.load %arg4[%c0_33, %c0_34, %c0_35] : memref<1x32x256xf32, #tpu.memory_space<vmem>>, vector<1x32x256xf32>
      %80 = vector.shape_cast %79 : vector<1x32x256xf32> to vector<32x256xf32>
      %81 = vector.shape_cast %78 : vector<32x256xf32> to vector<1x32x256xf32>
      tpu.vector_store %arg4[%c0_33, %c0_34, %c0_35], %81 {strides = array<i32>} : memref<1x32x256xf32, #tpu.memory_space<vmem>>, vector<1x32x256xf32>,
    } else {
    }
    %c0 = arith.constant 0 : index
    %c0_1 = arith.constant 0 : index
    %3 = vector.load %arg5[%c0, %c0_1] : memref<96x256xf32, #tpu.memory_space<vmem>>, vector<32x256xf32>
    %c256_i32 = arith.constant 256 : i32
    %4 = arith.muli %arg1, %c256_i32 : i32
    %5 = tpu.assume_multiple %4, 256 : i32
    %c32 = arith.constant 32 : index
    %6 = arith.index_cast %5 : i32 to index
    %7 = vector.load %arg5[%c32, %6] : memref<96x256xf32, #tpu.memory_space<vmem>>, vector<32x256xf32>
    %c64 = arith.constant 64 : index
    %8 = arith.index_cast %5 : i32 to index
    %9 = vector.load %arg5[%c64, %8] : memref<96x256xf32, #tpu.memory_space<vmem>>, vector<32x256xf32>
    %cst = arith.constant dense<0.000000e+00> : vector<256x256xf32>
    %10 = tpu.matmul %7, %3, %cst {dimension_numbers = #tpu.dot_dimension_numbers<[0], [0], [1], [1], [0, 1, 1, 1], [], []>} : vector<32x256xf32>, vector<32x256xf32>, vector<256x256xf32> -> vector<256x256xf32>
    %cst_2 = arith.constant dense<0xFF800000> : vector<256xf32>
    %11 = vector.multi_reduction <maximumf>, %10, %cst_2 [1] : vector<256x256xf32> to vector<256xf32>
    %12 = vector.shape_cast %11 : vector<256xf32> to vector<256x1xf32>
    %13 = vector.broadcast %12 : vector<256x1xf32> to vector<256x256xf32>
    %14 = arith.subf %10, %13 : vector<256x256xf32>
    %15 = math.exp %14 : vector<256x256xf32>
    %cst_3 = arith.constant dense<0.000000e+00> : vector<256xf32>
    %16 = vector.multi_reduction <add>, %15, %cst_3 [1] : vector<256x256xf32> to vector<256xf32>
    %17 = vector.shape_cast %16 : vector<256xf32> to vector<256x1xf32>
    %18 = tpu.reciprocal %17 {approx = true} : vector<256x1xf32> -> vector<256x1xf32>
    %19 = vector.broadcast %18 : vector<256x1xf32> to vector<256x256xf32>
    %20 = arith.mulf %15, %19 : vector<256x256xf32>
    %c0_4 = arith.constant 0 : index
    %c0_5 = arith.constant 0 : index
    %c0_6 = arith.constant 0 : index
    %21 = vector.load %arg4[%c0_4, %c0_5, %c0_6] : memref<1x32x256xf32, #tpu.memory_space<vmem>>, vector<1x32x256xf32>
    %22 = vector.shape_cast %21 : vector<1x32x256xf32> to vector<32x256xf32>
    %cst_7 = arith.constant dense<0.000000e+00> : vector<32x256xf32>
    %23 = tpu.matmul %9, %20, %cst_7 {dimension_numbers = #tpu.dot_dimension_numbers<[1], [0], [0], [1], [0, 0, 1, 1], [], []>} : vector<32x256xf32>, vector<256x256xf32>, vector<32x256xf32> -> vector<32x256xf32>
    %24 = arith.addf %22, %23 : vector<32x256xf32>
    %c0_8 = arith.constant 0 : index
    %c0_9 = arith.constant 0 : index
    %c0_10 = arith.constant 0 : index
    %25 = vector.load %arg4[%c0_8, %c0_9, %c0_10] : memref<1x32x256xf32, #tpu.memory_space<vmem>>, vector<1x32x256xf32>
    %26 = vector.shape_cast %25 : vector<1x32x256xf32> to vector<32x256xf32>
    %27 = vector.shape_cast %24 : vector<32x256xf32> to vector<1x32x256xf32>
    tpu.vector_store %arg4[%c0_8, %c0_9, %c0_10], %27 {strides = array<i32>} : memref<1x32x256xf32, #tpu.memory_space<vmem>>, vector<1x32x256xf32>,
    return
  }
  func.func @transform_0(%arg0: i32, %arg1: i32) -> (i32, i32, i32) {
    %c0_i32 = arith.constant 0 : i32
    %c0_i32_0 = arith.constant 0 : i32
    %c0_i32_1 = arith.constant 0 : i32
    return %arg0, %c0_i32, %c0_i32_0 : i32, i32, i32
  }
  func.func @transform_1(%arg0: i32, %arg1: i32) -> (i32, i32) {
    %c0_i32 = arith.constant 0 : i32
    %c0_i32_0 = arith.constant 0 : i32
    %c0_i32_1 = arith.constant 0 : i32
    return %c0_i32, %c0_i32_0 : i32, i32
  }
  func.func @transform_2(%arg0: i32, %arg1: i32) -> (i32, i32, i32) {
    %c0_i32 = arith.constant 0 : i32
    %c0_i32_0 = arith.constant 0 : i32
    %c0_i32_1 = arith.constant 0 : i32
    return %arg0, %c0_i32, %c0_i32_0 : i32, i32, i32
  }
}

</mosaic_0001>

<llo_original>
// kernel: multihead_self_attention.1
$region0: #{multihead_self_attention.1}
  #allocation0 [shape = 'u32[]', space=smem, size = 0x4, offset = 0x4, fixed_abs, tag = 'smem constant byte address 0x4 - core index']
  #allocation1 [shape = 'u32[144,128]{1,0:T(1,128)}', space=vmem, size = 0x12000, scoped, tag = 'internal scratch']
  #allocation2 [shape = 'f32[96,256]{1,0:T(8,128)}', space=vmem, size = 0x18000, scoped, tag = 'scratch operand']
  %s0 = inlined_call_operand.vmem [shape: f32[2,32,256], index: 0, kind: input, shape index: {}]
  %s1 = inlined_call_operand.vmem [shape: f32[96,32], index: 1, kind: input, shape index: {}]
  %s2 = inlined_call_operand.vmem [shape: f32[2,32,256], index: 2, kind: output, shape index: {}]
  %s3 = sld [smem:[#allocation0]]
  $region45: #{multihead_self_attention.1} parent=0
    _
  %s5 = ssub.s32 1, %s3
  %s6 = scalar_select 0, %s5, %s3
  loop: start=0, step=1, limit=4
  $region2: #{multihead_self_attention.1} parent=0 // loop_pre_header
    _
  $region3: #{multihead_self_attention.1} parent=0 // loop_header
    %s8 = sphi 0, %s12
    %p9 = scmp.ge.s32.totalorder %s8, 4
    %s15 = sphi 0, %s27
    %s16 = sphi 0, %s23
    %s17 = sphi 0, %s15
    %s18 = sphi 0, %s16
    %s19 = sphi 0, %s17
    %s20 = sphi 0, %s18
    %s30 = sphi 0, %s32
    %s33 = sphi 0, %s30
    %s34 = sphi 0, %s33
    %s50 = sphi 0, %s34
    %s54 = sphi 0, %s54
    %s56 = sphi 0, %s54
    %s57 = sphi 0, %s56
    %s71 = sphi 0, %s57
    %s77 = sphi 0, %s79
    %s80 = sphi 0, %s77
    %s81 = sphi 0, %s80
    %s97 = sphi 0, %s81
  $region4: #{multihead_self_attention.1} parent=0 // loop_header_branch
    %11 = sbr.rel (%p9) target = $region8
  $region5: #{multihead_self_attention.1} parent=0 // loop_body
    %s13 = ssub.s32 %s8, 1
    %s14 = ssub.s32 %s8, 2
    %s21 = sadd.s32 1, %s16
    %p22 = scmp.ge.s32.totalorder %s21, 1
    %s23 = scalar_select %p22, 0, %s21
    %s24 = sadd.s32 1, %s15
    %s25 = scalar_select %p22, %s24, %s15
    %p26 = scmp.ge.s32.totalorder %s25, 2
    %s27 = scalar_select %p26, 0, %s25
    %s28 = ssub.s32 %s15, %s27
    %p29 = scmp.eq.s32.totalorder %s28, 0
    %s31 = sadd.s32 %s30, 1
    %s32 = scalar_select %p29, %s30, %s31
    %p35 = pneg %p29
    %p36 = scmp.eq.s32.totalorder %s8, 1
    %p37 = por %p35, %p36
    %p38 = scmp.ne.s32.totalorder %s30, %s33
    %p39 = scmp.eq.s32.totalorder %s8, 0
    %p40 = por %p38, %p39
    %p41 = scmp.ne.s32.totalorder %s30, %s33
    %p42 = scmp.eq.s32.totalorder %s13, 1
    %p43 = por %p41, %p42
    %p44 = scmp.ne.s32.totalorder %s33, %s34
    %p45 = scmp.eq.s32.totalorder %s13, 0
    %p46 = por %p44, %p45
    %p47 = scmp.ne.s32.totalorder %s33, %s34
    %p48 = scmp.eq.s32.totalorder %s14, 1
    %p49 = por %p47, %p48
    %p51 = scmp.ne.s32.totalorder %s34, %s50
    %p52 = scmp.eq.s32.totalorder %s14, 0
    %p53 = por %p51, %p52
    %s55 = sadd.s32 %s54, 1
    %p58 = scmp.eq.s32.totalorder %s8, 1
    %p59 = scmp.ne.s32.totalorder %s54, %s56
    %p60 = scmp.eq.s32.totalorder %s8, 0
    %p61 = por %p59, %p60
    %p62 = scmp.ne.s32.totalorder %s54, %s56
    %p63 = scmp.eq.s32.totalorder %s13, 1
    %p64 = por %p62, %p63
    %p65 = scmp.ne.s32.totalorder %s56, %s57
    %p66 = scmp.eq.s32.totalorder %s13, 0
    %p67 = por %p65, %p66
    %p68 = scmp.ne.s32.totalorder %s56, %s57
    %p69 = scmp.eq.s32.totalorder %s14, 1
    %p70 = por %p68, %p69
    %p72 = scmp.ne.s32.totalorder %s57, %s71
    %p73 = scmp.eq.s32.totalorder %s14, 0
    %p74 = por %p72, %p73
    %s75 = ssub.s32 %s15, %s27
    %p76 = scmp.eq.s32.totalorder %s75, 0
    %s78 = sadd.s32 %s77, 1
    %s79 = scalar_select %p76, %s77, %s78
    %p82 = pneg %p76
    %p83 = scmp.eq.s32.totalorder %s8, 1
    %p84 = por %p82, %p83
    %p85 = scmp.ne.s32.totalorder %s77, %s80
    %p86 = scmp.eq.s32.totalorder %s8, 0
    %p87 = por %p85, %p86
    %p88 = scmp.ne.s32.totalorder %s77, %s80
    %p89 = scmp.eq.s32.totalorder %s13, 1
    %p90 = por %p88, %p89
    %p91 = scmp.ne.s32.totalorder %s80, %s81
    %p92 = scmp.eq.s32.totalorder %s13, 0
    %p93 = por %p91, %p92
    %p94 = scmp.ne.s32.totalorder %s80, %s81
    %p95 = scmp.eq.s32.totalorder %s14, 1
    %p96 = por %p94, %p95
    %p98 = scmp.ne.s32.totalorder %s81, %s97
    %p99 = scmp.eq.s32.totalorder %s14, 0
    %p100 = por %p98, %p99
    %p101 = scmp.le.s32.totalorder 1, %s8
    %p102 = scmp.lt.s32.totalorder %s8, 3
    %p103 = pnand %p101, %p102
    %p104 = pneg %p103
    // Predicated region
    $region9: #{multihead_self_attention.1} parent=5 // pred_check
      _
    $region10: #{multihead_self_attention.1} parent=5 // pred_check_branch
      %106 = sbr.rel (%p103) target = $region12
    $region11: #{multihead_self_attention.1} parent=5 // pred_region
      %s107 = ssub.s32 %s8, 1
      // Predicated region
      $region13: #{multihead_self_attention.1} parent=11 // pred_check
        %p108 = pneg %p67
      $region14: #{multihead_self_attention.1} parent=11 // pred_check_branch
        %110 = sbr.rel (%p108) target = $region16
      $region15: #{multihead_self_attention.1} parent=11 // pred_region
        _
      $region16: #{multihead_self_attention.1} parent=11 // pred_fallthru
        _
    $region12: #{multihead_self_attention.1} parent=5 // pred_fallthru
      _
    %p111 = scmp.lt.s32.totalorder %s8, 2
    // Predicated region
    $region17: #{multihead_self_attention.1} parent=5 // pred_check
      %p112 = pneg %p111
    $region18: #{multihead_self_attention.1} parent=5 // pred_check_branch
      %114 = sbr.rel (%p112) target = $region20
    $region19: #{multihead_self_attention.1} parent=5 // pred_region
      // Predicated region
      $region21: #{multihead_self_attention.1} parent=19 // pred_check
        %p115 = pneg %p40
      $region22: #{multihead_self_attention.1} parent=19 // pred_check_branch
        %117 = sbr.rel (%p115) target = $region24
      $region23: #{multihead_self_attention.1} parent=19 // pred_region
        %p118 = scmp.lt.s32.totalorder %s15, 1
        %s119 = scalar_select %p118, %s15, 1
        %s120 = smul.addr %s119, 8
        %s121 = smul.addr %s120, 8
        %s122 = scalar_lea.vmem %s0, %s121
      $region24: #{multihead_self_attention.1} parent=19 // pred_fallthru
        _
    $region20: #{multihead_self_attention.1} parent=5 // pred_fallthru
      _
    %p123 = scmp.le.s32.totalorder 1, %s8
    %p124 = scmp.lt.s32.totalorder %s8, 3
    %p125 = pnand %p123, %p124
    %p126 = pneg %p125
    // Predicated region
    $region25: #{multihead_self_attention.1} parent=5 // pred_check
      _
    $region26: #{multihead_self_attention.1} parent=5 // pred_check_branch
      %128 = sbr.rel (%p125) target = $region28
    $region27: #{multihead_self_attention.1} parent=5 // pred_region
      %s129 = ssub.s32 %s8, 1
      %p130 = scmp.lt.s32.totalorder %s17, 1
      %s131 = scalar_select %p130, %s17, 1
      %s132 = smul.addr %s131, 8
      %s133 = smul.addr %s132, 8
      %s134 = scalar_lea.vmem %s0, %s133
      %p135 = pneg %p46
      %p136 = pneg %p43
      %p137 = pneg %p67
      %p138 = pneg %p64
      %p139 = pneg %p93
      %p140 = pneg %p90
      %p141 = scmp.lt.s32.totalorder %s17, 1
      %s142 = scalar_select %p141, %s17, 1
      %s143 = smul.addr %s142, 8
      %s144 = smul.addr %s143, 8
      %s145 = scalar_lea.vmem %s2, %s144
      %p146 = scmp.lt.s32.totalorder %s17, 1
      %s147 = scalar_select %p146, %s17, 1
      %s148 = smul.addr %s147, 8
      %s149 = smul.addr %s148, 8
      %s150 = scalar_lea.vmem %s0, %s149
      %p151 = scmp.lt.s32.totalorder %s17, 1
      %s152 = scalar_select %p151, %s17, 1
      %s153 = smul.addr %s152, 8
      %s154 = smul.addr %s153, 8
      %s155 = scalar_lea.vmem %s2, %s154
      %p156 = scmp.eq.s32.totalorder %s18, 0
      // Predicated region
      $region29: #{multihead_self_attention.1} parent=27 // pred_check
        %p157 = pneg %p156
      $region30: #{multihead_self_attention.1} parent=27 // pred_check_branch
        %159 = sbr.rel (%p157) target = $region32
      $region31: #{multihead_self_attention.1} parent=27 // pred_region
        %v160 = vlaneseq
        %v161 = vshrl.u32 %v160, 7
        %v162 = vadd.s32 %v161, 8
        %v163 = vadd.s32 %v161, 16
        %v164 = vadd.s32 %v161, 24
        %vm165 = vcmp.lt.s32.totalorder %v161, 16
        %vm166 = vcmp.lt.s32.totalorder %v162, 16
        %vm167 = vcmp.lt.s32.totalorder %v163, 16
        %vm168 = vcmp.lt.s32.totalorder %v164, 16
        %v169 = vsub.s32 %v161, 16
        %v170 = vsub.s32 %v162, 16
        %v171 = vsub.s32 %v164, 16
        %v172 = vsel %vm165, %v161, %v169
        %v173 = vsel %vm166, %v162, %v170
        %v174 = vsel %vm167, %v163, %v161
        %v175 = vsel %vm168, %v164, %v171
        %v176 = vand.u32 %v172, 1
        %v177 = vand.u32 %v173, 1
        %v178 = vand.u32 %v174, 1
        %v179 = vand.u32 %v175, 1
        %v180 = vsub.s32 %v172, %v176
        %v181 = vsub.s32 %v173, %v177
        %v182 = vsub.s32 %v174, %v178
        %v183 = vsub.s32 %v175, %v179
        %v184 = vcvt.s32.f32 %v180
        %v185 = vcvt.s32.f32 %v181
        %v186 = vcvt.s32.f32 %v182
        %v187 = vcvt.s32.f32 %v183
        %v188 = vmul.f32 %v184, -0.5756463
        %v189 = vmul.f32 %v185, -0.5756463
        %v190 = vmul.f32 %v186, -0.5756463
        %v191 = vmul.f32 %v187, -0.5756463
        %v192 = vmul.f32 %v188, 1.442695
        %v193 = vpow.pop %v192
        %v194 = vmul.f32 %v189, 1.442695
        %v195 = vpow.pop %v194
        %v196 = vmul.f32 %v190, 1.442695
        %v197 = vpow.pop %v196
        %v198 = vmul.f32 %v191, 1.442695
        %v199 = vpow.pop %v198
        %v200 = vand.u32 %v161, 1
        %v201 = vand.u32 %v162, 1
        %v202 = vand.u32 %v163, 1
        %v203 = vand.u32 %v164, 1
        %vm204 = vcmp.eq.s32.totalorder %v200, 0
        %vm205 = vcmp.eq.s32.totalorder %v201, 0
        %vm206 = vcmp.eq.s32.totalorder %v202, 0
        %vm207 = vcmp.eq.s32.totalorder %v203, 0
        %v208 = vsel %vm204, -1.5707964, 0.0
        %v209 = vsel %vm205, -1.5707964, 0.0
        %v210 = vsel %vm206, -1.5707964, 0.0
        %v211 = vsel %vm207, -1.5707964, 0.0
        %v212 = vlaneseq
        %v213 = vand.u32 %v212, 127
        %v214 = vadd.s32 %v213, 128
        %v215 = vcvt.s32.f32 %v213
        %v216 = vcvt.s32.f32 %v214
        %v217 = vrcp.pop 16.0
        %v218 = vmul.f32 %v215, %v217
        %v219 = vmul.f32 %v216, %v217
        %v220 = vfloor.f32 %v218
        %v221 = vfloor.f32 %v219
        %v222 = vmul.f32 %v220, 16.0
        %v223 = vmul.f32 %v221, 16.0
        %v224 = vsub.f32 %v215, %v222
        %v225 = vsub.f32 %v216, %v223
        %v226 = vsel %vm165, 1, 0
        %v227 = vsel %vm166, 1, 0
        %v228 = vsel %vm167, 1, 0
        %v229 = vsel %vm168, 1, 0
        %vm230 = vcmp.eq.s32.totalorder %v226, 1
        %vm231 = vcmp.eq.s32.totalorder %v227, 1
        %vm232 = vcmp.eq.s32.totalorder %v228, 1
        %vm233 = vcmp.eq.s32.totalorder %v229, 1
        %v234 = vsel %vm230, %v224, %v220
        %v235 = vsel %vm230, %v225, %v221
        %v236 = vsel %vm231, %v224, %v220
        %v237 = vsel %vm231, %v225, %v221
        %v238 = vsel %vm232, %v224, %v220
        %v239 = vsel %vm232, %v225, %v221
        %v240 = vsel %vm233, %v224, %v220
        %v241 = vsel %vm233, %v225, %v221
        %v242 = vmul.f32 %v234, %v193
        %v243 = vmul.f32 %v235, %v193
        %v244 = vmul.f32 %v236, %v195
        %v245 = vmul.f32 %v237, %v195
        %v246 = vmul.f32 %v238, %v197
        %v247 = vmul.f32 %v239, %v197
        %v248 = vmul.f32 %v240, %v199
        %v249 = vmul.f32 %v241, %v199
        %v250 = vadd.f32 %v242, %v208
        %v251 = vadd.f32 %v243, %v208
        %v252 = vadd.f32 %v244, %v209
        %v253 = vadd.f32 %v245, %v209
        %v254 = vadd.f32 %v246, %v210
        %v255 = vadd.f32 %v247, %v210
        %v256 = vadd.f32 %v248, %v211
        %v257 = vadd.f32 %v249, %v211
        %v258 = vand.u32 2147483647, %v250
        %vm259 = vcmp.le.f32.partialorder %v258, 0.7853982
        %vm260 = vcmp.lt.s32.totalorder %v250, 0
        %v261 = vand.u32 %v250, 2139095040
        %v262 = vshrl.u32 %v261, 23
        %v263 = vsub.s32 %v262, 127
        %v264 = vand.u32 2147483647, %v250
        %v265 = vand.u32 %v264, 8388607
        %v266 = vor.u32 %v265, 8388608
        %v267 = vsub.s32 0, %v266
        %v268 = vadd.s32 %v263, 1
        %vm269 = vcmp.gt.s32.totalorder %v268, 0
        %v270 = vsel %vm269, %v268, 0
        %v271 = vshrl.u32 %v270, 5
        %v272 = vand.u32 %v270, 31
        %v273 = vsub.s32 32, %v272
        %v274 = vshrl.u32 683565275, %v273
        %v275 = vshll.u32 683565275, %v272
        %v276 = vshrl.u32 2475754826, %v273
        %v277 = vor.u32 %v275, %v276
        %v278 = vshll.u32 2475754826, %v272
        %v279 = vshrl.u32 2131351028, %v273
        %v280 = vor.u32 %v278, %v279
        %v281 = vshll.u32 2131351028, %v272
        %v282 = vshrl.u32 2102212464, %v273
        %v283 = vor.u32 %v281, %v282
        %v284 = vshll.u32 2102212464, %v272
        %v285 = vshrl.u32 920167782, %v273
        %v286 = vor.u32 %v284, %v285
        %v287 = vshll.u32 920167782, %v272
        %v288 = vshrl.u32 1326507024, %v273
        %v289 = vor.u32 %v287, %v288
        %vm290 = vcmp.lt.s32.totalorder %v271, 1
        %vm291 = vcmp.lt.s32.totalorder %v271, 2
        %vm292 = vcmp.lt.s32.totalorder %v271, 3
        %vm293 = vcmp.lt.s32.totalorder %v271, 4
        %v294 = vsel %vm290, %v274, %v277
        %v295 = vsel %vm293, %v283, 2102212464
        %v296 = vsel %vm292, %v280, %v295
        %v297 = vsel %vm291, %v294, %v296
        %v298 = vsel %vm290, %v277, %v280
        %v299 = vsel %vm293, %v286, 920167782
        %v300 = vsel %vm292, %v283, %v299
        %v301 = vsel %vm291, %v298, %v300
        %v302 = vsel %vm290, %v280, %v283
        %v303 = vsel %vm293, %v289, 1326507024
        %v304 = vsel %vm292, %v286, %v303
        %v305 = vsel %vm291, %v302, %v304
        %v306 = vshll.u32 %v266, 8
        %v307 = vmul.u32.u64.compose %v306, %v305
        %v308 = vextract.low.u32 %v307
        %v309 = vextract.high.u32 %v307
        %v310 = vmul.u32.u64.compose %v306, %v301
        %v311 = vextract.low.u32 %v310
        %v312 = vextract.high.u32 %v310
        %v313 = vmul.u32 %v306, %v297
        %v314 = vadd.s32 %v309, %v311
        %vm315 = vc.u32 %v309, %v311
        %v316 = vadd.s32 %v312, 1
        %v317 = vsel %vm315, %v316, %v312
        %v318 = vadd.s32 %v313, %v317
        %v319 = vadd.s32 %v318, 536870912
        %v320 = vshrl.u32 %v319, 30
        %v321 = vshll.u32 %v320, 30
        %v322 = vsub.s32 %v318, %v321
        %vm323 = vcmp.lt.s32.totalorder %v322, 0
        %v324 = vsub.s32 0, %v322
        %v325 = vsel %vm323, %v324, %v322
        %v326 = vclz %v325
        %v327 = vsub.s32 %v326, 2
        %vm328 = vcmp.gt.s32.totalorder 0, %v327
        %v329 = vsel %vm328, 0, %v327
        %v330 = vsub.s32 32, %v329
        %v331 = vshll.u32 %v322, %v329
        %v332 = vshrl.u32 %v314, %v330
        %v333 = vor.u32 %v331, %v332
        %v334 = vsub.s32 4294967266, %v329
        %v335 = vadd.s32 %v334, 127
        %v336 = vshll.u32 %v335, 23
        %v337 = vor.u32 4788187, %v336
        %v338 = vand.u32 2147483647, %v337
        %v340 = vcvt.s32.f32 %v333
        %v341 = vmul.f32 %v340, %v338
        %v342 = vxor.u32 %v341, 2147483648
        %v343 = vsel %vm260, %v342, %v341
        %v344 = vsub.s32 4, %v320
        %v345 = vsel %vm260, %v344, %v320
        %v346 = vsel %vm259, %v250, %v343
        %v347 = vsel %vm259, 0, %v345
        %v348 = vcosq.f32.pop %v346
        %v349 = vsinq.f32.pop %v346
        %vm350 = vweird.f32 %v250
        %v351 = vand.u32 %v347, 3
        %vm352 = vcmp.lt.s32.totalorder %v351, 2
        %vm353 = vcmp.eq.s32.totalorder %v351, 0
        %v354 = vxor.u32 %v349, 2147483648
        %v355 = vsel %vm353, %v348, %v354
        %vm356 = vcmp.eq.s32.totalorder %v351, 2
        %v357 = vxor.u32 %v348, 2147483648
        %v358 = vsel %vm356, %v357, %v349
        %v359 = vsel %vm352, %v355, %v358
        %v360 = vsel %vm350, nan, %v359
        %v361 = vand.u32 2147483647, %v251
        %vm362 = vcmp.le.f32.partialorder %v361, 0.7853982
        %vm363 = vcmp.lt.s32.totalorder %v251, 0
        %v364 = vand.u32 %v251, 2139095040
        %v365 = vshrl.u32 %v364, 23
        %v366 = vsub.s32 %v365, 127
        %v367 = vand.u32 2147483647, %v251
        %v368 = vand.u32 %v367, 8388607
        %v369 = vor.u32 %v368, 8388608
        %v370 = vsub.s32 0, %v369
        %v371 = vadd.s32 %v366, 1
        %vm372 = vcmp.gt.s32.totalorder %v371, 0
        %v373 = vsel %vm372, %v371, 0
        %v374 = vshrl.u32 %v373, 5
        %v375 = vand.u32 %v373, 31
        %v376 = vsub.s32 32, %v375
        %v377 = vshrl.u32 683565275, %v376
        %v378 = vshll.u32 683565275, %v375
        %v379 = vshrl.u32 2475754826, %v376
        %v380 = vor.u32 %v378, %v379
        %v381 = vshll.u32 2475754826, %v375
        %v382 = vshrl.u32 2131351028, %v376
        %v383 = vor.u32 %v381, %v382
        %v384 = vshll.u32 2131351028, %v375
        %v385 = vshrl.u32 2102212464, %v376
        %v386 = vor.u32 %v384, %v385
        %v387 = vshll.u32 2102212464, %v375
        %v388 = vshrl.u32 920167782, %v376
        %v389 = vor.u32 %v387, %v388
        %v390 = vshll.u32 920167782, %v375
        %v391 = vshrl.u32 1326507024, %v376
        %v392 = vor.u32 %v390, %v391
        %vm393 = vcmp.lt.s32.totalorder %v374, 1
        %vm394 = vcmp.lt.s32.totalorder %v374, 2
        %vm395 = vcmp.lt.s32.totalorder %v374, 3
        %vm396 = vcmp.lt.s32.totalorder %v374, 4
        %v397 = vsel %vm393, %v377, %v380
        %v398 = vsel %vm396, %v386, 2102212464
        %v399 = vsel %vm395, %v383, %v398
        %v400 = vsel %vm394, %v397, %v399
        %v401 = vsel %vm393, %v380, %v383
        %v402 = vsel %vm396, %v389, 920167782
        %v403 = vsel %vm395, %v386, %v402
        %v404 = vsel %vm394, %v401, %v403
        %v405 = vsel %vm393, %v383, %v386
        %v406 = vsel %vm396, %v392, 1326507024
        %v407 = vsel %vm395, %v389, %v406
        %v408 = vsel %vm394, %v405, %v407
        %v409 = vshll.u32 %v369, 8
        %v410 = vmul.u32.u64.compose %v409, %v408
        %v411 = vextract.low.u32 %v410
        %v412 = vextract.high.u32 %v410
        %v413 = vmul.u32.u64.compose %v409, %v404
        %v414 = vextract.low.u32 %v413
        %v415 = vextract.high.u32 %v413
        %v416 = vmul.u32 %v409, %v400
        %v417 = vadd.s32 %v412, %v414
        %vm418 = vc.u32 %v412, %v414
        %v419 = vadd.s32 %v415, 1
        %v420 = vsel %vm418, %v419, %v415
        %v421 = vadd.s32 %v416, %v420
        %v422 = vadd.s32 %v421, 536870912
        %v423 = vshrl.u32 %v422, 30
        %v424 = vshll.u32 %v423, 30
        %v425 = vsub.s32 %v421, %v424
        %vm426 = vcmp.lt.s32.totalorder %v425, 0
        %v427 = vsub.s32 0, %v425
        %v428 = vsel %vm426, %v427, %v425
        %v429 = vclz %v428
        %v430 = vsub.s32 %v429, 2
        %vm431 = vcmp.gt.s32.totalorder 0, %v430
        %v432 = vsel %vm431, 0, %v430
        %v433 = vsub.s32 32, %v432
        %v434 = vshll.u32 %v425, %v432
        %v435 = vshrl.u32 %v417, %v433
        %v436 = vor.u32 %v434, %v435
        %v437 = vsub.s32 4294967266, %v432
        %v438 = vadd.s32 %v437, 127
        %v439 = vshll.u32 %v438, 23
        %v440 = vor.u32 4788187, %v439
        %v441 = vand.u32 2147483647, %v440
        %v443 = vcvt.s32.f32 %v436
        %v444 = vmul.f32 %v443, %v441
        %v445 = vxor.u32 %v444, 2147483648
        %v446 = vsel %vm363, %v445, %v444
        %v447 = vsub.s32 4, %v423
        %v448 = vsel %vm363, %v447, %v423
        %v449 = vsel %vm362, %v251, %v446
        %v450 = vsel %vm362, 0, %v448
        %v451 = vcosq.f32.pop %v449
        %v452 = vsinq.f32.pop %v449
        %vm453 = vweird.f32 %v251
        %v454 = vand.u32 %v450, 3
        %vm455 = vcmp.lt.s32.totalorder %v454, 2
        %vm456 = vcmp.eq.s32.totalorder %v454, 0
        %v457 = vxor.u32 %v452, 2147483648
        %v458 = vsel %vm456, %v451, %v457
        %vm459 = vcmp.eq.s32.totalorder %v454, 2
        %v460 = vxor.u32 %v451, 2147483648
        %v461 = vsel %vm459, %v460, %v452
        %v462 = vsel %vm455, %v458, %v461
        %v463 = vsel %vm453, nan, %v462
        %v464 = vand.u32 2147483647, %v252
        %vm465 = vcmp.le.f32.partialorder %v464, 0.7853982
        %vm466 = vcmp.lt.s32.totalorder %v252, 0
        %v467 = vand.u32 %v252, 2139095040
        %v468 = vshrl.u32 %v467, 23
        %v469 = vsub.s32 %v468, 127
        %v470 = vand.u32 2147483647, %v252
        %v471 = vand.u32 %v470, 8388607
        %v472 = vor.u32 %v471, 8388608
        %v473 = vsub.s32 0, %v472
        %v474 = vadd.s32 %v469, 1
        %vm475 = vcmp.gt.s32.totalorder %v474, 0
        %v476 = vsel %vm475, %v474, 0
        %v477 = vshrl.u32 %v476, 5
        %v478 = vand.u32 %v476, 31
        %v479 = vsub.s32 32, %v478
        %v480 = vshrl.u32 683565275, %v479
        %v481 = vshll.u32 683565275, %v478
        %v482 = vshrl.u32 2475754826, %v479
        %v483 = vor.u32 %v481, %v482
        %v484 = vshll.u32 2475754826, %v478
        %v485 = vshrl.u32 2131351028, %v479
        %v486 = vor.u32 %v484, %v485
        %v487 = vshll.u32 2131351028, %v478
        %v488 = vshrl.u32 2102212464, %v479
        %v489 = vor.u32 %v487, %v488
        %v490 = vshll.u32 2102212464, %v478
        %v491 = vshrl.u32 920167782, %v479
        %v492 = vor.u32 %v490, %v491
        %v493 = vshll.u32 920167782, %v478
        %v494 = vshrl.u32 1326507024, %v479
        %v495 = vor.u32 %v493, %v494
        %vm496 = vcmp.lt.s32.totalorder %v477, 1
        %vm497 = vcmp.lt.s32.totalorder %v477, 2
        %vm498 = vcmp.lt.s32.totalorder %v477, 3
        %vm499 = vcmp.lt.s32.totalorder %v477, 4
        %v500 = vsel %vm496, %v480, %v483
        %v501 = vsel %vm499, %v489, 2102212464
        %v502 = vsel %vm498, %v486, %v501
        %v503 = vsel %vm497, %v500, %v502
        %v504 = vsel %vm496, %v483, %v486
        %v505 = vsel %vm499, %v492, 920167782
        %v506 = vsel %vm498, %v489, %v505
        %v507 = vsel %vm497, %v504, %v506
        %v508 = vsel %vm496, %v486, %v489
        %v509 = vsel %vm499, %v495, 1326507024
        %v510 = vsel %vm498, %v492, %v509
        %v511 = vsel %vm497, %v508, %v510
        %v512 = vshll.u32 %v472, 8
        %v513 = vmul.u32.u64.compose %v512, %v511
        %v514 = vextract.low.u32 %v513
        %v515 = vextract.high.u32 %v513
        %v516 = vmul.u32.u64.compose %v512, %v507
        %v517 = vextract.low.u32 %v516
        %v518 = vextract.high.u32 %v516
        %v519 = vmul.u32 %v512, %v503
        %v520 = vadd.s32 %v515, %v517
        %vm521 = vc.u32 %v515, %v517
        %v522 = vadd.s32 %v518, 1
        %v523 = vsel %vm521, %v522, %v518
        %v524 = vadd.s32 %v519, %v523
        %v525 = vadd.s32 %v524, 536870912
        %v526 = vshrl.u32 %v525, 30
        %v527 = vshll.u32 %v526, 30
        %v528 = vsub.s32 %v524, %v527
        %vm529 = vcmp.lt.s32.totalorder %v528, 0
        %v530 = vsub.s32 0, %v528
        %v531 = vsel %vm529, %v530, %v528
        %v532 = vclz %v531
        %v533 = vsub.s32 %v532, 2
        %vm534 = vcmp.gt.s32.totalorder 0, %v533
        %v535 = vsel %vm534, 0, %v533
        %v536 = vsub.s32 32, %v535
        %v537 = vshll.u32 %v528, %v535
        %v538 = vshrl.u32 %v520, %v536
        %v539 = vor.u32 %v537, %v538
        %v540 = vsub.s32 4294967266, %v535
        %v541 = vadd.s32 %v540, 127
        %v542 = vshll.u32 %v541, 23
        %v543 = vor.u32 4788187, %v542
        %v544 = vand.u32 2147483647, %v543
        %v546 = vcvt.s32.f32 %v539
        %v547 = vmul.f32 %v546, %v544
        %v548 = vxor.u32 %v547, 2147483648
        %v549 = vsel %vm466, %v548, %v547
        %v550 = vsub.s32 4, %v526
        %v551 = vsel %vm466, %v550, %v526
        %v552 = vsel %vm465, %v252, %v549
        %v553 = vsel %vm465, 0, %v551
        %v554 = vcosq.f32.pop %v552
        %v555 = vsinq.f32.pop %v552
        %vm556 = vweird.f32 %v252
        %v557 = vand.u32 %v553, 3
        %vm558 = vcmp.lt.s32.totalorder %v557, 2
        %vm559 = vcmp.eq.s32.totalorder %v557, 0
        %v560 = vxor.u32 %v555, 2147483648
        %v561 = vsel %vm559, %v554, %v560
        %vm562 = vcmp.eq.s32.totalorder %v557, 2
        %v563 = vxor.u32 %v554, 2147483648
        %v564 = vsel %vm562, %v563, %v555
        %v565 = vsel %vm558, %v561, %v564
        %v566 = vsel %vm556, nan, %v565
        %v567 = vand.u32 2147483647, %v253
        %vm568 = vcmp.le.f32.partialorder %v567, 0.7853982
        %vm569 = vcmp.lt.s32.totalorder %v253, 0
        %v570 = vand.u32 %v253, 2139095040
        %v571 = vshrl.u32 %v570, 23
        %v572 = vsub.s32 %v571, 127
        %v573 = vand.u32 2147483647, %v253
        %v574 = vand.u32 %v573, 8388607
        %v575 = vor.u32 %v574, 8388608
        %v576 = vsub.s32 0, %v575
        %v577 = vadd.s32 %v572, 1
        %vm578 = vcmp.gt.s32.totalorder %v577, 0
        %v579 = vsel %vm578, %v577, 0
        %v580 = vshrl.u32 %v579, 5
        %v581 = vand.u32 %v579, 31
        %v582 = vsub.s32 32, %v581
        %v583 = vshrl.u32 683565275, %v582
        %v584 = vshll.u32 683565275, %v581
        %v585 = vshrl.u32 2475754826, %v582
        %v586 = vor.u32 %v584, %v585
        %v587 = vshll.u32 2475754826, %v581
        %v588 = vshrl.u32 2131351028, %v582
        %v589 = vor.u32 %v587, %v588
        %v590 = vshll.u32 2131351028, %v581
        %v591 = vshrl.u32 2102212464, %v582
        %v592 = vor.u32 %v590, %v591
        %v593 = vshll.u32 2102212464, %v581
        %v594 = vshrl.u32 920167782, %v582
        %v595 = vor.u32 %v593, %v594
        %v596 = vshll.u32 920167782, %v581
        %v597 = vshrl.u32 1326507024, %v582
        %v598 = vor.u32 %v596, %v597
        %vm599 = vcmp.lt.s32.totalorder %v580, 1
        %vm600 = vcmp.lt.s32.totalorder %v580, 2
        %vm601 = vcmp.lt.s32.totalorder %v580, 3
        %vm602 = vcmp.lt.s32.totalorder %v580, 4
        %v603 = vsel %vm599, %v583, %v586
        %v604 = vsel %vm602, %v592, 2102212464
        %v605 = vsel %vm601, %v589, %v604
        %v606 = vsel %vm600, %v603, %v605
        %v607 = vsel %vm599, %v586, %v589
        %v608 = vsel %vm602, %v595, 920167782
        %v609 = vsel %vm601, %v592, %v608
        %v610 = vsel %vm600, %v607, %v609
        %v611 = vsel %vm599, %v589, %v592
        %v612 = vsel %vm602, %v598, 1326507024
        %v613 = vsel %vm601, %v595, %v612
        %v614 = vsel %vm600, %v611, %v613
        %v615 = vshll.u32 %v575, 8
        %v616 = vmul.u32.u64.compose %v615, %v614
        %v617 = vextract.low.u32 %v616
        %v618 = vextract.high.u32 %v616
        %v619 = vmul.u32.u64.compose %v615, %v610
        %v620 = vextract.low.u32 %v619
        %v621 = vextract.high.u32 %v619
        %v622 = vmul.u32 %v615, %v606
        %v623 = vadd.s32 %v618, %v620
        %vm624 = vc.u32 %v618, %v620
        %v625 = vadd.s32 %v621, 1
        %v626 = vsel %vm624, %v625, %v621
        %v627 = vadd.s32 %v622, %v626
        %v628 = vadd.s32 %v627, 536870912
        %v629 = vshrl.u32 %v628, 30
        %v630 = vshll.u32 %v629, 30
        %v631 = vsub.s32 %v627, %v630
        %vm632 = vcmp.lt.s32.totalorder %v631, 0
        %v633 = vsub.s32 0, %v631
        %v634 = vsel %vm632, %v633, %v631
        %v635 = vclz %v634
        %v636 = vsub.s32 %v635, 2
        %vm637 = vcmp.gt.s32.totalorder 0, %v636
        %v638 = vsel %vm637, 0, %v636
        %v639 = vsub.s32 32, %v638
        %v640 = vshll.u32 %v631, %v638
        %v641 = vshrl.u32 %v623, %v639
        %v642 = vor.u32 %v640, %v641
        %v643 = vsub.s32 4294967266, %v638
        %v644 = vadd.s32 %v643, 127
        %v645 = vshll.u32 %v644, 23
        %v646 = vor.u32 4788187, %v645
        %v647 = vand.u32 2147483647, %v646
        %v649 = vcvt.s32.f32 %v642
        %v650 = vmul.f32 %v649, %v647
        %v651 = vxor.u32 %v650, 2147483648
        %v652 = vsel %vm569, %v651, %v650
        %v653 = vsub.s32 4, %v629
        %v654 = vsel %vm569, %v653, %v629
        %v655 = vsel %vm568, %v253, %v652
        %v656 = vsel %vm568, 0, %v654
        %v657 = vcosq.f32.pop %v655
        %v658 = vsinq.f32.pop %v655
        %vm659 = vweird.f32 %v253
        %v660 = vand.u32 %v656, 3
        %vm661 = vcmp.lt.s32.totalorder %v660, 2
        %vm662 = vcmp.eq.s32.totalorder %v660, 0
        %v663 = vxor.u32 %v658, 2147483648
        %v664 = vsel %vm662, %v657, %v663
        %vm665 = vcmp.eq.s32.totalorder %v660, 2
        %v666 = vxor.u32 %v657, 2147483648
        %v667 = vsel %vm665, %v666, %v658
        %v668 = vsel %vm661, %v664, %v667
        %v669 = vsel %vm659, nan, %v668
        %v670 = vand.u32 2147483647, %v254
        %vm671 = vcmp.le.f32.partialorder %v670, 0.7853982
        %vm672 = vcmp.lt.s32.totalorder %v254, 0
        %v673 = vand.u32 %v254, 2139095040
        %v674 = vshrl.u32 %v673, 23
        %v675 = vsub.s32 %v674, 127
        %v676 = vand.u32 2147483647, %v254
        %v677 = vand.u32 %v676, 8388607
        %v678 = vor.u32 %v677, 8388608
        %v679 = vsub.s32 0, %v678
        %v680 = vadd.s32 %v675, 1
        %vm681 = vcmp.gt.s32.totalorder %v680, 0
        %v682 = vsel %vm681, %v680, 0
        %v683 = vshrl.u32 %v682, 5
        %v684 = vand.u32 %v682, 31
        %v685 = vsub.s32 32, %v684
        %v686 = vshrl.u32 683565275, %v685
        %v687 = vshll.u32 683565275, %v684
        %v688 = vshrl.u32 2475754826, %v685
        %v689 = vor.u32 %v687, %v688
        %v690 = vshll.u32 2475754826, %v684
        %v691 = vshrl.u32 2131351028, %v685
        %v692 = vor.u32 %v690, %v691
        %v693 = vshll.u32 2131351028, %v684
        %v694 = vshrl.u32 2102212464, %v685
        %v695 = vor.u32 %v693, %v694
        %v696 = vshll.u32 2102212464, %v684
        %v697 = vshrl.u32 920167782, %v685
        %v698 = vor.u32 %v696, %v697
        %v699 = vshll.u32 920167782, %v684
        %v700 = vshrl.u32 1326507024, %v685
        %v701 = vor.u32 %v699, %v700
        %vm702 = vcmp.lt.s32.totalorder %v683, 1
        %vm703 = vcmp.lt.s32.totalorder %v683, 2
        %vm704 = vcmp.lt.s32.totalorder %v683, 3
        %vm705 = vcmp.lt.s32.totalorder %v683, 4
        %v706 = vsel %vm702, %v686, %v689
        %v707 = vsel %vm705, %v695, 2102212464
        %v708 = vsel %vm704, %v692, %v707
        %v709 = vsel %vm703, %v706, %v708
        %v710 = vsel %vm702, %v689, %v692
        %v711 = vsel %vm705, %v698, 920167782
        %v712 = vsel %vm704, %v695, %v711
        %v713 = vsel %vm703, %v710, %v712
        %v714 = vsel %vm702, %v692, %v695
        %v715 = vsel %vm705, %v701, 1326507024
        %v716 = vsel %vm704, %v698, %v715
        %v717 = vsel %vm703, %v714, %v716
        %v718 = vshll.u32 %v678, 8
        %v719 = vmul.u32.u64.compose %v718, %v717
        %v720 = vextract.low.u32 %v719
        %v721 = vextract.high.u32 %v719
        %v722 = vmul.u32.u64.compose %v718, %v713
        %v723 = vextract.low.u32 %v722
        %v724 = vextract.high.u32 %v722
        %v725 = vmul.u32 %v718, %v709
        %v726 = vadd.s32 %v721, %v723
        %vm727 = vc.u32 %v721, %v723
        %v728 = vadd.s32 %v724, 1
        %v729 = vsel %vm727, %v728, %v724
        %v730 = vadd.s32 %v725, %v729
        %v731 = vadd.s32 %v730, 536870912
        %v732 = vshrl.u32 %v731, 30
        %v733 = vshll.u32 %v732, 30
        %v734 = vsub.s32 %v730, %v733
        %vm735 = vcmp.lt.s32.totalorder %v734, 0
        %v736 = vsub.s32 0, %v734
        %v737 = vsel %vm735, %v736, %v734
        %v738 = vclz %v737
        %v739 = vsub.s32 %v738, 2
        %vm740 = vcmp.gt.s32.totalorder 0, %v739
        %v741 = vsel %vm740, 0, %v739
        %v742 = vsub.s32 32, %v741
        %v743 = vshll.u32 %v734, %v741
        %v744 = vshrl.u32 %v726, %v742
        %v745 = vor.u32 %v743, %v744
        %v746 = vsub.s32 4294967266, %v741
        %v747 = vadd.s32 %v746, 127
        %v748 = vshll.u32 %v747, 23
        %v749 = vor.u32 4788187, %v748
        %v750 = vand.u32 2147483647, %v749
        %v752 = vcvt.s32.f32 %v745
        %v753 = vmul.f32 %v752, %v750
        %v754 = vxor.u32 %v753, 2147483648
        %v755 = vsel %vm672, %v754, %v753
        %v756 = vsub.s32 4, %v732
        %v757 = vsel %vm672, %v756, %v732
        %v758 = vsel %vm671, %v254, %v755
        %v759 = vsel %vm671, 0, %v757
        %v760 = vcosq.f32.pop %v758
        %v761 = vsinq.f32.pop %v758
        %vm762 = vweird.f32 %v254
        %v763 = vand.u32 %v759, 3
        %vm764 = vcmp.lt.s32.totalorder %v763, 2
        %vm765 = vcmp.eq.s32.totalorder %v763, 0
        %v766 = vxor.u32 %v761, 2147483648
        %v767 = vsel %vm765, %v760, %v766
        %vm768 = vcmp.eq.s32.totalorder %v763, 2
        %v769 = vxor.u32 %v760, 2147483648
        %v770 = vsel %vm768, %v769, %v761
        %v771 = vsel %vm764, %v767, %v770
        %v772 = vsel %vm762, nan, %v771
        %v773 = vand.u32 2147483647, %v255
        %vm774 = vcmp.le.f32.partialorder %v773, 0.7853982
        %vm775 = vcmp.lt.s32.totalorder %v255, 0
        %v776 = vand.u32 %v255, 2139095040
        %v777 = vshrl.u32 %v776, 23
        %v778 = vsub.s32 %v777, 127
        %v779 = vand.u32 2147483647, %v255
        %v780 = vand.u32 %v779, 8388607
        %v781 = vor.u32 %v780, 8388608
        %v782 = vsub.s32 0, %v781
        %v783 = vadd.s32 %v778, 1
        %vm784 = vcmp.gt.s32.totalorder %v783, 0
        %v785 = vsel %vm784, %v783, 0
        %v786 = vshrl.u32 %v785, 5
        %v787 = vand.u32 %v785, 31
        %v788 = vsub.s32 32, %v787
        %v789 = vshrl.u32 683565275, %v788
        %v790 = vshll.u32 683565275, %v787
        %v791 = vshrl.u32 2475754826, %v788
        %v792 = vor.u32 %v790, %v791
        %v793 = vshll.u32 2475754826, %v787
        %v794 = vshrl.u32 2131351028, %v788
        %v795 = vor.u32 %v793, %v794
        %v796 = vshll.u32 2131351028, %v787
        %v797 = vshrl.u32 2102212464, %v788
        %v798 = vor.u32 %v796, %v797
        %v799 = vshll.u32 2102212464, %v787
        %v800 = vshrl.u32 920167782, %v788
        %v801 = vor.u32 %v799, %v800
        %v802 = vshll.u32 920167782, %v787
        %v803 = vshrl.u32 1326507024, %v788
        %v804 = vor.u32 %v802, %v803
        %vm805 = vcmp.lt.s32.totalorder %v786, 1
        %vm806 = vcmp.lt.s32.totalorder %v786, 2
        %vm807 = vcmp.lt.s32.totalorder %v786, 3
        %vm808 = vcmp.lt.s32.totalorder %v786, 4
        %v809 = vsel %vm805, %v789, %v792
        %v810 = vsel %vm808, %v798, 2102212464
        %v811 = vsel %vm807, %v795, %v810
        %v812 = vsel %vm806, %v809, %v811
        %v813 = vsel %vm805, %v792, %v795
        %v814 = vsel %vm808, %v801, 920167782
        %v815 = vsel %vm807, %v798, %v814
        %v816 = vsel %vm806, %v813, %v815
        %v817 = vsel %vm805, %v795, %v798
        %v818 = vsel %vm808, %v804, 1326507024
        %v819 = vsel %vm807, %v801, %v818
        %v820 = vsel %vm806, %v817, %v819
        %v821 = vshll.u32 %v781, 8
        %v822 = vmul.u32.u64.compose %v821, %v820
        %v823 = vextract.low.u32 %v822
        %v824 = vextract.high.u32 %v822
        %v825 = vmul.u32.u64.compose %v821, %v816
        %v826 = vextract.low.u32 %v825
        %v827 = vextract.high.u32 %v825
        %v828 = vmul.u32 %v821, %v812
        %v829 = vadd.s32 %v824, %v826
        %vm830 = vc.u32 %v824, %v826
        %v831 = vadd.s32 %v827, 1
        %v832 = vsel %vm830, %v831, %v827
        %v833 = vadd.s32 %v828, %v832
        %v834 = vadd.s32 %v833, 536870912
        %v835 = vshrl.u32 %v834, 30
        %v836 = vshll.u32 %v835, 30
        %v837 = vsub.s32 %v833, %v836
        %vm838 = vcmp.lt.s32.totalorder %v837, 0
        %v839 = vsub.s32 0, %v837
        %v840 = vsel %vm838, %v839, %v837
        %v841 = vclz %v840
        %v842 = vsub.s32 %v841, 2
        %vm843 = vcmp.gt.s32.totalorder 0, %v842
        %v844 = vsel %vm843, 0, %v842
        %v845 = vsub.s32 32, %v844
        %v846 = vshll.u32 %v837, %v844
        %v847 = vshrl.u32 %v829, %v845
        %v848 = vor.u32 %v846, %v847
        %v849 = vsub.s32 4294967266, %v844
        %v850 = vadd.s32 %v849, 127
        %v851 = vshll.u32 %v850, 23
        %v852 = vor.u32 4788187, %v851
        %v853 = vand.u32 2147483647, %v852
        %v855 = vcvt.s32.f32 %v848
        %v856 = vmul.f32 %v855, %v853
        %v857 = vxor.u32 %v856, 2147483648
        %v858 = vsel %vm775, %v857, %v856
        %v859 = vsub.s32 4, %v835
        %v860 = vsel %vm775, %v859, %v835
        %v861 = vsel %vm774, %v255, %v858
        %v862 = vsel %vm774, 0, %v860
        %v863 = vcosq.f32.pop %v861
        %v864 = vsinq.f32.pop %v861
        %vm865 = vweird.f32 %v255
        %v866 = vand.u32 %v862, 3
        %vm867 = vcmp.lt.s32.totalorder %v866, 2
        %vm868 = vcmp.eq.s32.totalorder %v866, 0
        %v869 = vxor.u32 %v864, 2147483648
        %v870 = vsel %vm868, %v863, %v869
        %vm871 = vcmp.eq.s32.totalorder %v866, 2
        %v872 = vxor.u32 %v863, 2147483648
        %v873 = vsel %vm871, %v872, %v864
        %v874 = vsel %vm867, %v870, %v873
        %v875 = vsel %vm865, nan, %v874
        %v876 = vand.u32 2147483647, %v256
        %vm877 = vcmp.le.f32.partialorder %v876, 0.7853982
        %vm878 = vcmp.lt.s32.totalorder %v256, 0
        %v879 = vand.u32 %v256, 2139095040
        %v880 = vshrl.u32 %v879, 23
        %v881 = vsub.s32 %v880, 127
        %v882 = vand.u32 2147483647, %v256
        %v883 = vand.u32 %v882, 8388607
        %v884 = vor.u32 %v883, 8388608
        %v885 = vsub.s32 0, %v884
        %v886 = vadd.s32 %v881, 1
        %vm887 = vcmp.gt.s32.totalorder %v886, 0
        %v888 = vsel %vm887, %v886, 0
        %v889 = vshrl.u32 %v888, 5
        %v890 = vand.u32 %v888, 31
        %v891 = vsub.s32 32, %v890
        %v892 = vshrl.u32 683565275, %v891
        %v893 = vshll.u32 683565275, %v890
        %v894 = vshrl.u32 2475754826, %v891
        %v895 = vor.u32 %v893, %v894
        %v896 = vshll.u32 2475754826, %v890
        %v897 = vshrl.u32 2131351028, %v891
        %v898 = vor.u32 %v896, %v897
        %v899 = vshll.u32 2131351028, %v890
        %v900 = vshrl.u32 2102212464, %v891
        %v901 = vor.u32 %v899, %v900
        %v902 = vshll.u32 2102212464, %v890
        %v903 = vshrl.u32 920167782, %v891
        %v904 = vor.u32 %v902, %v903
        %v905 = vshll.u32 920167782, %v890
        %v906 = vshrl.u32 1326507024, %v891
        %v907 = vor.u32 %v905, %v906
        %vm908 = vcmp.lt.s32.totalorder %v889, 1
        %vm909 = vcmp.lt.s32.totalorder %v889, 2
        %vm910 = vcmp.lt.s32.totalorder %v889, 3
        %vm911 = vcmp.lt.s32.totalorder %v889, 4
        %v912 = vsel %vm908, %v892, %v895
        %v913 = vsel %vm911, %v901, 2102212464
        %v914 = vsel %vm910, %v898, %v913
        %v915 = vsel %vm909, %v912, %v914
        %v916 = vsel %vm908, %v895, %v898
        %v917 = vsel %vm911, %v904, 920167782
        %v918 = vsel %vm910, %v901, %v917
        %v919 = vsel %vm909, %v916, %v918
        %v920 = vsel %vm908, %v898, %v901
        %v921 = vsel %vm911, %v907, 1326507024
        %v922 = vsel %vm910, %v904, %v921
        %v923 = vsel %vm909, %v920, %v922
        %v924 = vshll.u32 %v884, 8
        %v925 = vmul.u32.u64.compose %v924, %v923
        %v926 = vextract.low.u32 %v925
        %v927 = vextract.high.u32 %v925
        %v928 = vmul.u32.u64.compose %v924, %v919
        %v929 = vextract.low.u32 %v928
        %v930 = vextract.high.u32 %v928
        %v931 = vmul.u32 %v924, %v915
        %v932 = vadd.s32 %v927, %v929
        %vm933 = vc.u32 %v927, %v929
        %v934 = vadd.s32 %v930, 1
        %v935 = vsel %vm933, %v934, %v930
        %v936 = vadd.s32 %v931, %v935
        %v937 = vadd.s32 %v936, 536870912
        %v938 = vshrl.u32 %v937, 30
        %v939 = vshll.u32 %v938, 30
        %v940 = vsub.s32 %v936, %v939
        %vm941 = vcmp.lt.s32.totalorder %v940, 0
        %v942 = vsub.s32 0, %v940
        %v943 = vsel %vm941, %v942, %v940
        %v944 = vclz %v943
        %v945 = vsub.s32 %v944, 2
        %vm946 = vcmp.gt.s32.totalorder 0, %v945
        %v947 = vsel %vm946, 0, %v945
        %v948 = vsub.s32 32, %v947
        %v949 = vshll.u32 %v940, %v947
        %v950 = vshrl.u32 %v932, %v948
        %v951 = vor.u32 %v949, %v950
        %v952 = vsub.s32 4294967266, %v947
        %v953 = vadd.s32 %v952, 127
        %v954 = vshll.u32 %v953, 23
        %v955 = vor.u32 4788187, %v954
        %v956 = vand.u32 2147483647, %v955
        %v958 = vcvt.s32.f32 %v951
        %v959 = vmul.f32 %v958, %v956
        %v960 = vxor.u32 %v959, 2147483648
        %v961 = vsel %vm878, %v960, %v959
        %v962 = vsub.s32 4, %v938
        %v963 = vsel %vm878, %v962, %v938
        %v964 = vsel %vm877, %v256, %v961
        %v965 = vsel %vm877, 0, %v963
        %v966 = vcosq.f32.pop %v964
        %v967 = vsinq.f32.pop %v964
        %vm968 = vweird.f32 %v256
        %v969 = vand.u32 %v965, 3
        %vm970 = vcmp.lt.s32.totalorder %v969, 2
        %vm971 = vcmp.eq.s32.totalorder %v969, 0
        %v972 = vxor.u32 %v967, 2147483648
        %v973 = vsel %vm971, %v966, %v972
        %vm974 = vcmp.eq.s32.totalorder %v969, 2
        %v975 = vxor.u32 %v966, 2147483648
        %v976 = vsel %vm974, %v975, %v967
        %v977 = vsel %vm970, %v973, %v976
        %v978 = vsel %vm968, nan, %v977
        %v979 = vand.u32 2147483647, %v257
        %vm980 = vcmp.le.f32.partialorder %v979, 0.7853982
        %vm981 = vcmp.lt.s32.totalorder %v257, 0
        %v982 = vand.u32 %v257, 2139095040
        %v983 = vshrl.u32 %v982, 23
        %v984 = vsub.s32 %v983, 127
        %v985 = vand.u32 2147483647, %v257
        %v986 = vand.u32 %v985, 8388607
        %v987 = vor.u32 %v986, 8388608
        %v988 = vsub.s32 0, %v987
        %v989 = vadd.s32 %v984, 1
        %vm990 = vcmp.gt.s32.totalorder %v989, 0
        %v991 = vsel %vm990, %v989, 0
        %v992 = vshrl.u32 %v991, 5
        %v993 = vand.u32 %v991, 31
        %v994 = vsub.s32 32, %v993
        %v995 = vshrl.u32 683565275, %v994
        %v996 = vshll.u32 683565275, %v993
        %v997 = vshrl.u32 2475754826, %v994
        %v998 = vor.u32 %v996, %v997
        %v999 = vshll.u32 2475754826, %v993
        %v1000 = vshrl.u32 2131351028, %v994
        %v1001 = vor.u32 %v999, %v1000
        %v1002 = vshll.u32 2131351028, %v993
        %v1003 = vshrl.u32 2102212464, %v994
        %v1004 = vor.u32 %v1002, %v1003
        %v1005 = vshll.u32 2102212464, %v993
        %v1006 = vshrl.u32 920167782, %v994
        %v1007 = vor.u32 %v1005, %v1006
        %v1008 = vshll.u32 920167782, %v993
        %v1009 = vshrl.u32 1326507024, %v994
        %v1010 = vor.u32 %v1008, %v1009
        %vm1011 = vcmp.lt.s32.totalorder %v992, 1
        %vm1012 = vcmp.lt.s32.totalorder %v992, 2
        %vm1013 = vcmp.lt.s32.totalorder %v992, 3
        %vm1014 = vcmp.lt.s32.totalorder %v992, 4
        %v1015 = vsel %vm1011, %v995, %v998
        %v1016 = vsel %vm1014, %v1004, 2102212464
        %v1017 = vsel %vm1013, %v1001, %v1016
        %v1018 = vsel %vm1012, %v1015, %v1017
        %v1019 = vsel %vm1011, %v998, %v1001
        %v1020 = vsel %vm1014, %v1007, 920167782
        %v1021 = vsel %vm1013, %v1004, %v1020
        %v1022 = vsel %vm1012, %v1019, %v1021
        %v1023 = vsel %vm1011, %v1001, %v1004
        %v1024 = vsel %vm1014, %v1010, 1326507024
        %v1025 = vsel %vm1013, %v1007, %v1024
        %v1026 = vsel %vm1012, %v1023, %v1025
        %v1027 = vshll.u32 %v987, 8
        %v1028 = vmul.u32.u64.compose %v1027, %v1026
        %v1029 = vextract.low.u32 %v1028
        %v1030 = vextract.high.u32 %v1028
        %v1031 = vmul.u32.u64.compose %v1027, %v1022
        %v1032 = vextract.low.u32 %v1031
        %v1033 = vextract.high.u32 %v1031
        %v1034 = vmul.u32 %v1027, %v1018
        %v1035 = vadd.s32 %v1030, %v1032
        %vm1036 = vc.u32 %v1030, %v1032
        %v1037 = vadd.s32 %v1033, 1
        %v1038 = vsel %vm1036, %v1037, %v1033
        %v1039 = vadd.s32 %v1034, %v1038
        %v1040 = vadd.s32 %v1039, 536870912
        %v1041 = vshrl.u32 %v1040, 30
        %v1042 = vshll.u32 %v1041, 30
        %v1043 = vsub.s32 %v1039, %v1042
        %vm1044 = vcmp.lt.s32.totalorder %v1043, 0
        %v1045 = vsub.s32 0, %v1043
        %v1046 = vsel %vm1044, %v1045, %v1043
        %v1047 = vclz %v1046
        %v1048 = vsub.s32 %v1047, 2
        %vm1049 = vcmp.gt.s32.totalorder 0, %v1048
        %v1050 = vsel %vm1049, 0, %v1048
        %v1051 = vsub.s32 32, %v1050
        %v1052 = vshll.u32 %v1043, %v1050
        %v1053 = vshrl.u32 %v1035, %v1051
        %v1054 = vor.u32 %v1052, %v1053
        %v1055 = vsub.s32 4294967266, %v1050
        %v1056 = vadd.s32 %v1055, 127
        %v1057 = vshll.u32 %v1056, 23
        %v1058 = vor.u32 4788187, %v1057
        %v1059 = vand.u32 2147483647, %v1058
        %v1061 = vcvt.s32.f32 %v1054
        %v1062 = vmul.f32 %v1061, %v1059
        %v1063 = vxor.u32 %v1062, 2147483648
        %v1064 = vsel %vm981, %v1063, %v1062
        %v1065 = vsub.s32 4, %v1041
        %v1066 = vsel %vm981, %v1065, %v1041
        %v1067 = vsel %vm980, %v257, %v1064
        %v1068 = vsel %vm980, 0, %v1066
        %v1069 = vcosq.f32.pop %v1067
        %v1070 = vsinq.f32.pop %v1067
        %vm1071 = vweird.f32 %v257
        %v1072 = vand.u32 %v1068, 3
        %vm1073 = vcmp.lt.s32.totalorder %v1072, 2
        %vm1074 = vcmp.eq.s32.totalorder %v1072, 0
        %v1075 = vxor.u32 %v1070, 2147483648
        %v1076 = vsel %vm1074, %v1069, %v1075
        %vm1077 = vcmp.eq.s32.totalorder %v1072, 2
        %v1078 = vxor.u32 %v1069, 2147483648
        %v1079 = vsel %vm1077, %v1078, %v1070
        %v1080 = vsel %vm1073, %v1076, %v1079
        %v1081 = vsel %vm1071, nan, %v1080
        %v1082 = vld [vmem:[%s150] sm:$0xff]
        %v1083 = vld [vmem:[%s150 + $0x8] sm:$0xff]
        %v1084 = vld [vmem:[%s150 + $0x10] sm:$0xff]
        %v1085 = vld [vmem:[%s150 + $0x18] sm:$0xff]
        %v1086 = vld [vmem:[%s150 + $0x20] sm:$0xff]
        %v1087 = vld [vmem:[%s150 + $0x28] sm:$0xff]
        %v1088 = vld [vmem:[%s150 + $0x30] sm:$0xff]
        %v1089 = vld [vmem:[%s150 + $0x38] sm:$0xff]
        %v1090 = vadd.f32 %v1082, %v360
        %v1091 = vadd.f32 %v1083, %v463
        %v1092 = vadd.f32 %v1084, %v566
        %v1093 = vadd.f32 %v1085, %v669
        %v1094 = vadd.f32 %v1086, %v772
        %v1095 = vadd.f32 %v1087, %v875
        %v1096 = vadd.f32 %v1088, %v978
        %v1097 = vadd.f32 %v1089, %v1081
        %v1098 = vld [vmem:[%s1] sm:$0xff]
        %v1099 = vld [vmem:[%s1 + $0x8] sm:$0xff]
        %v1100 = vld [vmem:[%s1 + $0x10] sm:$0xff]
        %v1101 = vld [vmem:[%s1 + $0x18] sm:$0xff]
        %v1102 = vld [vmem:[%s1 + $0x20] sm:$0xff]
        %v1103 = vld [vmem:[%s1 + $0x28] sm:$0xff]
        %v1104 = vld [vmem:[%s1 + $0x30] sm:$0xff]
        %v1105 = vld [vmem:[%s1 + $0x38] sm:$0xff]
        %v1106 = vld [vmem:[%s1 + $0x40] sm:$0xff]
        %v1107 = vld [vmem:[%s1 + $0x48] sm:$0xff]
        %v1108 = vld [vmem:[%s1 + $0x50] sm:$0xff]
        %v1109 = vld [vmem:[%s1 + $0x58] sm:$0xff]
        %vm1110 = vcmask 261120
        %v1112 = vsel %vm1110, %v1098, 0
        %v1115 = vsel %vm1110, %v1099, 0
        %v1118 = vsel %vm1110, %v1100, 0
        %v1121 = vsel %vm1110, %v1101, 0
        %v1124 = vsel %vm1110, %v1102, 0
        %v1127 = vsel %vm1110, %v1103, 0
        %v1130 = vsel %vm1110, %v1104, 0
        %v1133 = vsel %vm1110, %v1105, 0
        %v1136 = vsel %vm1110, %v1106, 0
        %v1139 = vsel %vm1110, %v1107, 0
        %v1142 = vsel %vm1110, %v1108, 0
        %v1145 = vsel %vm1110, %v1109, 0
        %1147 = vmatprep.subr.mxu0 0.0
        %1148 = vmatpush1.msra.mxu0 0.0
        %1149 = vmatprep.subr.mxu0 0.0
        %1150 = vmatpush1.msra.mxu0 0.0
        %1151 = vmatprep.subr.mxu0 0.0
        %1152 = vmatpush1.msra.mxu0 0.0
        %1153 = vmatprep.subr.mxu0 0.0
        %1154 = vmatpush1.msra.mxu0 0.0
        %1155 = vmatprep.subr.mxu0 0.0
        %1156 = vmatpush1.msra.mxu0 0.0
        %1157 = vmatprep.subr.mxu0 0.0
        %1158 = vmatpush1.msra.mxu0 0.0
        %1159 = vmatprep.subr.mxu0 0.0
        %1160 = vmatpush1.msra.mxu0 0.0
        %1161 = vmatprep.subr.mxu0 0.0
        %1162 = vmatpush1.msra.mxu0 0.0
        %1163 = vmatprep.subr.mxu0 0.0
        %1164 = vmatpush1.msra.mxu0 0.0
        %1165 = vmatprep.subr.mxu0 0.0
        %1166 = vmatpush1.msra.mxu0 0.0
        %1167 = vmatprep.subr.mxu0 0.0
        %1168 = vmatpush1.msra.mxu0 0.0
        %1169 = vmatprep.subr.mxu0 0.0
        %1170 = vmatpush1.msra.mxu0 0.0
        %1171 = vmatprep.subr.mxu0 %v1097
        %1172 = vmatpush1.msra.mxu0 %v1096
        %1173 = vmatprep.subr.mxu0 %v1095
        %1174 = vmatpush1.msra.mxu0 %v1094
        %1175 = vmatprep.subr.mxu0 %v1093
        %1176 = vmatpush1.msra.mxu0 %v1092
        %1177 = vmatprep.subr.mxu0 %v1091
        %1178 = vmatpush1.msra.mxu0 %v1090
        %1179 = vmatprep.subr.mxu0 0.0
        %1180 = vmatpush2.msra.mxu0 0.0
        %1181 = vmatprep.subr.mxu0 0.0
        %1182 = vmatpush2.msra.mxu0 0.0
        %1183 = vmatprep.subr.mxu0 0.0
        %1184 = vmatpush2.msra.mxu0 0.0
        %1185 = vmatprep.subr.mxu0 0.0
        %1186 = vmatpush2.msra.mxu0 0.0
        %1187 = vmatprep.subr.mxu0 0.0
        %1188 = vmatpush2.msra.mxu0 0.0
        %1189 = vmatprep.subr.mxu0 0.0
        %1190 = vmatpush2.msra.mxu0 0.0
        %1191 = vmatprep.subr.mxu0 0.0
        %1192 = vmatpush2.msra.mxu0 0.0
        %1193 = vmatprep.subr.mxu0 0.0
        %1194 = vmatpush2.msra.mxu0 0.0
        %1195 = vmatprep.subr.mxu0 0.0
        %1196 = vmatpush2.msra.mxu0 0.0
        %1197 = vmatprep.subr.mxu0 0.0
        %1198 = vmatpush2.msra.mxu0 0.0
        %1199 = vmatprep.subr.mxu0 0.0
        %1200 = vmatpush2.msra.mxu0 0.0
        %1201 = vmatprep.subr.mxu0 0.0
        %1202 = vmatpush2.msra.mxu0 0.0
        %1203 = vmatprep.subr.mxu0 0.0
        %1204 = vmatpush2.msra.mxu0 0.0
        %1205 = vmatprep.subr.mxu0 0.0
        %1206 = vmatpush2.msra.mxu0 0.0
        %1207 = vmatprep.subr.mxu0 0.0
        %1208 = vmatpush2.msra.mxu0 0.0
        %1209 = vmatprep.subr.mxu0 0.0
        %1210 = vmatpush2.msra.mxu0 0.0
        %1211 = vmatprep.mubr.f32.mxu0 0.0
        %1212 = vmatmul.mubr.f32.gmra.mxu0 %v1112
        %v1213 = vpop.f32.mrf.mxu0
        %v1214 = vadd.f32 0.0, %v1213
        %v1215 = vpop.f32.mrf.mxu0
        %v1216 = vadd.f32 0.0, %v1215
        %1217 = vmatprep.mubr.f32.mxu0 0.0
        %1218 = vmatmul.mubr.f32.gmra.mxu0 %v1115
        %v1219 = vpop.f32.mrf.mxu0
        %v1220 = vadd.f32 0.0, %v1219
        %v1221 = vpop.f32.mrf.mxu0
        %v1222 = vadd.f32 0.0, %v1221
        %1223 = vmatprep.mubr.f32.mxu0 0.0
        %1224 = vmatmul.mubr.f32.gmra.mxu0 %v1118
        %v1225 = vpop.f32.mrf.mxu0
        %v1226 = vadd.f32 0.0, %v1225
        %v1227 = vpop.f32.mrf.mxu0
        %v1228 = vadd.f32 0.0, %v1227
        %1229 = vmatprep.mubr.f32.mxu0 0.0
        %1230 = vmatmul.mubr.f32.gmra.mxu0 %v1121
        %v1231 = vpop.f32.mrf.mxu0
        %v1232 = vadd.f32 0.0, %v1231
        %v1233 = vpop.f32.mrf.mxu0
        %v1234 = vadd.f32 0.0, %v1233
        %1235 = vmatprep.mubr.f32.mxu0 0.0
        %1236 = vmatmul.mubr.f32.gmra.mxu0 %v1124
        %v1237 = vpop.f32.mrf.mxu0
        %v1238 = vadd.f32 0.0, %v1237
        %v1239 = vpop.f32.mrf.mxu0
        %v1240 = vadd.f32 0.0, %v1239
        %1241 = vmatprep.mubr.f32.mxu0 0.0
        %1242 = vmatmul.mubr.f32.gmra.mxu0 %v1127
        %v1243 = vpop.f32.mrf.mxu0
        %v1244 = vadd.f32 0.0, %v1243
        %v1245 = vpop.f32.mrf.mxu0
        %v1246 = vadd.f32 0.0, %v1245
        %1247 = vmatprep.mubr.f32.mxu0 0.0
        %1248 = vmatmul.mubr.f32.gmra.mxu0 %v1130
        %v1249 = vpop.f32.mrf.mxu0
        %v1250 = vadd.f32 0.0, %v1249
        %v1251 = vpop.f32.mrf.mxu0
        %v1252 = vadd.f32 0.0, %v1251
        %1253 = vmatprep.mubr.f32.mxu0 0.0
        %1254 = vmatmul.mubr.f32.gmra.mxu0 %v1133
        %v1255 = vpop.f32.mrf.mxu0
        %v1256 = vadd.f32 0.0, %v1255
        %v1257 = vpop.f32.mrf.mxu0
        %v1258 = vadd.f32 0.0, %v1257
        %1259 = vmatprep.mubr.f32.mxu0 0.0
        %1260 = vmatmul.mubr.f32.gmra.mxu0 %v1136
        %v1261 = vpop.f32.mrf.mxu0
        %v1262 = vadd.f32 0.0, %v1261
        %v1263 = vpop.f32.mrf.mxu0
        %v1264 = vadd.f32 0.0, %v1263
        %1265 = vmatprep.mubr.f32.mxu0 0.0
        %1266 = vmatmul.mubr.f32.gmra.mxu0 %v1139
        %v1267 = vpop.f32.mrf.mxu0
        %v1268 = vadd.f32 0.0, %v1267
        %v1269 = vpop.f32.mrf.mxu0
        %v1270 = vadd.f32 0.0, %v1269
        %1271 = vmatprep.mubr.f32.mxu0 0.0
        %1272 = vmatmul.mubr.f32.gmra.mxu0 %v1142
        %v1273 = vpop.f32.mrf.mxu0
        %v1274 = vadd.f32 0.0, %v1273
        %v1275 = vpop.f32.mrf.mxu0
        %v1276 = vadd.f32 0.0, %v1275
        %1277 = vmatprep.mubr.f32.mxu0 0.0
        %1278 = vmatmul.mubr.f32.gmra.mxu0 %v1145
        %v1279 = vpop.f32.mrf.mxu0
        %v1280 = vadd.f32 0.0, %v1279
        %v1281 = vpop.f32.mrf.mxu0
        %v1282 = vadd.f32 0.0, %v1281
        %1283 = vdwg.mxu0
        %1284 = vst [vmem:[#allocation2] sm:$0xff] %v1214
        %1285 = vst [vmem:[#allocation2 + $0x8] sm:$0xff] %v1216
        %1286 = vst [vmem:[#allocation2 + $0x10] sm:$0xff] %v1220
        %1287 = vst [vmem:[#allocation2 + $0x18] sm:$0xff] %v1222
        %1288 = vst [vmem:[#allocation2 + $0x20] sm:$0xff] %v1226
        %1289 = vst [vmem:[#allocation2 + $0x28] sm:$0xff] %v1228
        %1290 = vst [vmem:[#allocation2 + $0x30] sm:$0xff] %v1232
        %1291 = vst [vmem:[#allocation2 + $0x38] sm:$0xff] %v1234
        %1292 = vst [vmem:[#allocation2 + $0x40] sm:$0xff] %v1238
        %1293 = vst [vmem:[#allocation2 + $0x48] sm:$0xff] %v1240
        %1294 = vst [vmem:[#allocation2 + $0x50] sm:$0xff] %v1244
        %1295 = vst [vmem:[#allocation2 + $0x58] sm:$0xff] %v1246
        %1296 = vst [vmem:[#allocation2 + $0x60] sm:$0xff] %v1250
        %1297 = vst [vmem:[#allocation2 + $0x68] sm:$0xff] %v1252
        %1298 = vst [vmem:[#allocation2 + $0x70] sm:$0xff] %v1256
        %1299 = vst [vmem:[#allocation2 + $0x78] sm:$0xff] %v1258
        %1300 = vst [vmem:[#allocation2 + $0x80] sm:$0xff] %v1262
        %1301 = vst [vmem:[#allocation2 + $0x88] sm:$0xff] %v1264
        %1302 = vst [vmem:[#allocation2 + $0x90] sm:$0xff] %v1268
        %1303 = vst [vmem:[#allocation2 + $0x98] sm:$0xff] %v1270
        %1304 = vst [vmem:[#allocation2 + $0xa0] sm:$0xff] %v1274
        %1305 = vst [vmem:[#allocation2 + $0xa8] sm:$0xff] %v1276
        %1306 = vst [vmem:[#allocation2 + $0xb0] sm:$0xff] %v1280
        %1307 = vst [vmem:[#allocation2 + $0xb8] sm:$0xff] %v1282
        %v1308 = vld [vmem:[#allocation2] sm:$0xff]
        %v1309 = vld [vmem:[#allocation2 + $0x8] sm:$0xff]
        %v1310 = vld [vmem:[#allocation2 + $0x10] sm:$0xff]
        %v1311 = vld [vmem:[#allocation2 + $0x18] sm:$0xff]
        %v1312 = vld [vmem:[#allocation2 + $0x20] sm:$0xff]
        %v1313 = vld [vmem:[#allocation2 + $0x28] sm:$0xff]
        %v1314 = vld [vmem:[#allocation2 + $0x30] sm:$0xff]
        %v1315 = vld [vmem:[#allocation2 + $0x38] sm:$0xff]
        %v1316 = vmul.f32 %v1308, 0.17677669
        %v1317 = vmul.f32 %v1309, 0.17677669
        %v1318 = vmul.f32 %v1310, 0.17677669
        %v1319 = vmul.f32 %v1311, 0.17677669
        %v1320 = vmul.f32 %v1312, 0.17677669
        %v1321 = vmul.f32 %v1313, 0.17677669
        %v1322 = vmul.f32 %v1314, 0.17677669
        %v1323 = vmul.f32 %v1315, 0.17677669
        %1324 = vst [vmem:[#allocation2] sm:$0xff] %v1316
        %1325 = vst [vmem:[#allocation2 + $0x8] sm:$0xff] %v1317
        %1326 = vst [vmem:[#allocation2 + $0x10] sm:$0xff] %v1318
        %1327 = vst [vmem:[#allocation2 + $0x18] sm:$0xff] %v1319
        %1328 = vst [vmem:[#allocation2 + $0x20] sm:$0xff] %v1320
        %1329 = vst [vmem:[#allocation2 + $0x28] sm:$0xff] %v1321
        %1330 = vst [vmem:[#allocation2 + $0x30] sm:$0xff] %v1322
        %1331 = vst [vmem:[#allocation2 + $0x38] sm:$0xff] %v1323
        %1332 = vst [vmem:[%s155] sm:$0xff] 0.0
        %1333 = vst [vmem:[%s155 + $0x8] sm:$0xff] 0.0
        %1334 = vst [vmem:[%s155 + $0x10] sm:$0xff] 0.0
        %1335 = vst [vmem:[%s155 + $0x18] sm:$0xff] 0.0
        %1336 = vst [vmem:[%s155 + $0x20] sm:$0xff] 0.0
        %1337 = vst [vmem:[%s155 + $0x28] sm:$0xff] 0.0
        %1338 = vst [vmem:[%s155 + $0x30] sm:$0xff] 0.0
        %1339 = vst [vmem:[%s155 + $0x38] sm:$0xff] 0.0
      $region32: #{multihead_self_attention.1} parent=27 // pred_fallthru
        _
      %v1340 = vld [vmem:[#allocation2] sm:$0xff]
      %v1341 = vld [vmem:[#allocation2 + $0x8] sm:$0xff]
      %v1342 = vld [vmem:[#allocation2 + $0x10] sm:$0xff]
      %v1343 = vld [vmem:[#allocation2 + $0x18] sm:$0xff]
      %v1344 = vld [vmem:[#allocation2 + $0x20] sm:$0xff]
      %v1345 = vld [vmem:[#allocation2 + $0x28] sm:$0xff]
      %v1346 = vld [vmem:[#allocation2 + $0x30] sm:$0xff]
      %v1347 = vld [vmem:[#allocation2 + $0x38] sm:$0xff]
      %s1348 = smul.u32 %s18, 256
      %s1349 = sshra.s32 %s1348, 7
      %s1350 = sand.u32 %s1348, 127
      %s1351 = smul.addr %s1349, 8
      %s1352 = scalar_lea.vmem [#allocation2], %s1351
      %v1353 = vld [vmem:[%s1352 + $0x40] sm:$0xff]
      %v1354 = vld [vmem:[%s1352 + $0x48] sm:$0xff]
      %v1355 = vld [vmem:[%s1352 + $0x50] sm:$0xff]
      %v1356 = vld [vmem:[%s1352 + $0x58] sm:$0xff]
      %v1357 = vld [vmem:[%s1352 + $0x60] sm:$0xff]
      %v1358 = vld [vmem:[%s1352 + $0x68] sm:$0xff]
      %v1359 = vld [vmem:[%s1352 + $0x70] sm:$0xff]
      %v1360 = vld [vmem:[%s1352 + $0x78] sm:$0xff]
      %v1361 = vld [vmem:[%s1352 + $0x80] sm:$0xff]
      %v1362 = vld [vmem:[%s1352 + $0x88] sm:$0xff]
      %v1363 = vld [vmem:[%s1352 + $0x90] sm:$0xff]
      %v1364 = vld [vmem:[%s1352 + $0x98] sm:$0xff]
      %v1365 = vld [vmem:[%s1352 + $0xa0] sm:$0xff]
      %v1366 = vld [vmem:[%s1352 + $0xa8] sm:$0xff]
      %v1367 = vld [vmem:[%s1352 + $0xb0] sm:$0xff]
      %v1368 = vld [vmem:[%s1352 + $0xb8] sm:$0xff]
      %1369 = vxpose.xlu0.b32.start [1/16] %v1353, 128
      %1370 = vxpose.xlu0.b32.cont [2/16] %v1355, 128
      %1371 = vxpose.xlu0.b32.cont [3/16] %v1357, 128
      %1372 = vxpose.xlu0.b32.cont [4/16] %v1359, 128
      %1373 = vxpose.xlu0.b32.cont [5/16] 0.0, 128
      %1374 = vxpose.xlu0.b32.cont [6/16] 0.0, 128
      %1375 = vxpose.xlu0.b32.cont [7/16] 0.0, 128
      %1376 = vxpose.xlu0.b32.cont [8/16] 0.0, 128
      %1377 = vxpose.xlu0.b32.cont [9/16] 0.0, 128
      %1378 = vxpose.xlu0.b32.cont [10/16] 0.0, 128
      %1379 = vxpose.xlu0.b32.cont [11/16] 0.0, 128
      %1380 = vxpose.xlu0.b32.cont [12/16] 0.0, 128
      %1381 = vxpose.xlu0.b32.cont [13/16] 0.0, 128
      %1382 = vxpose.xlu0.b32.cont [14/16] 0.0, 128
      %1383 = vxpose.xlu0.b32.cont [15/16] 0.0, 128
      %1384 = vxpose.xlu0.b32.end [16/16] 0.0, 128
      %v1385 = vpop.trf.xlu0
      %v1386 = vpop.trf.xlu0
      %v1387 = vpop.trf.xlu0
      %v1388 = vpop.trf.xlu0
      %v1389 = vpop.trf.xlu0
      %v1390 = vpop.trf.xlu0
      %v1391 = vpop.trf.xlu0
      %v1392 = vpop.trf.xlu0
      %v1393 = vpop.trf.xlu0
      %v1394 = vpop.trf.xlu0
      %v1395 = vpop.trf.xlu0
      %v1396 = vpop.trf.xlu0
      %v1397 = vpop.trf.xlu0
      %v1398 = vpop.trf.xlu0
      %v1399 = vpop.trf.xlu0
      %v1400 = vpop.trf.xlu0
      %1401 = vxpose.xlu0.b32.start [1/16] %v1354, 128
      %1402 = vxpose.xlu0.b32.cont [2/16] %v1356, 128
      %1403 = vxpose.xlu0.b32.cont [3/16] %v1358, 128
      %1404 = vxpose.xlu0.b32.cont [4/16] %v1360, 128
      %1405 = vxpose.xlu0.b32.cont [5/16] 0.0, 128
      %1406 = vxpose.xlu0.b32.cont [6/16] 0.0, 128
      %1407 = vxpose.xlu0.b32.cont [7/16] 0.0, 128
      %1408 = vxpose.xlu0.b32.cont [8/16] 0.0, 128
      %1409 = vxpose.xlu0.b32.cont [9/16] 0.0, 128
      %1410 = vxpose.xlu0.b32.cont [10/16] 0.0, 128
      %1411 = vxpose.xlu0.b32.cont [11/16] 0.0, 128
      %1412 = vxpose.xlu0.b32.cont [12/16] 0.0, 128
      %1413 = vxpose.xlu0.b32.cont [13/16] 0.0, 128
      %1414 = vxpose.xlu0.b32.cont [14/16] 0.0, 128
      %1415 = vxpose.xlu0.b32.cont [15/16] 0.0, 128
      %1416 = vxpose.xlu0.b32.end [16/16] 0.0, 128
      %v1417 = vpop.trf.xlu0
      %v1418 = vpop.trf.xlu0
      %v1419 = vpop.trf.xlu0
      %v1420 = vpop.trf.xlu0
      %v1421 = vpop.trf.xlu0
      %v1422 = vpop.trf.xlu0
      %v1423 = vpop.trf.xlu0
      %v1424 = vpop.trf.xlu0
      %v1425 = vpop.trf.xlu0
      %v1426 = vpop.trf.xlu0
      %v1427 = vpop.trf.xlu0
      %v1428 = vpop.trf.xlu0
      %v1429 = vpop.trf.xlu0
      %v1430 = vpop.trf.xlu0
      %v1431 = vpop.trf.xlu0
      %v1432 = vpop.trf.xlu0
      %vm1433 = vcmask 261120
      %v1435 = vsel %vm1433, %v1385, 0
      %v1438 = vsel %vm1433, %v1386, 0
      %v1441 = vsel %vm1433, %v1387, 0
      %v1444 = vsel %vm1433, %v1388, 0
      %v1447 = vsel %vm1433, %v1389, 0
      %v1450 = vsel %vm1433, %v1390, 0
      %v1453 = vsel %vm1433, %v1391, 0
      %v1456 = vsel %vm1433, %v1392, 0
      %v1459 = vsel %vm1433, %v1393, 0
      %v1462 = vsel %vm1433, %v1394, 0
      %v1465 = vsel %vm1433, %v1395, 0
      %v1468 = vsel %vm1433, %v1396, 0
      %v1471 = vsel %vm1433, %v1397, 0
      %v1474 = vsel %vm1433, %v1398, 0
      %v1477 = vsel %vm1433, %v1399, 0
      %v1480 = vsel %vm1433, %v1400, 0
      %v1483 = vsel %vm1433, %v1417, 0
      %v1486 = vsel %vm1433, %v1418, 0
      %v1489 = vsel %vm1433, %v1419, 0
      %v1492 = vsel %vm1433, %v1420, 0
      %v1495 = vsel %vm1433, %v1421, 0
      %v1498 = vsel %vm1433, %v1422, 0
      %v1501 = vsel %vm1433, %v1423, 0
      %v1504 = vsel %vm1433, %v1424, 0
      %v1507 = vsel %vm1433, %v1425, 0
      %v1510 = vsel %vm1433, %v1426, 0
      %v1513 = vsel %vm1433, %v1427, 0
      %v1516 = vsel %vm1433, %v1428, 0
      %v1519 = vsel %vm1433, %v1429, 0
      %v1522 = vsel %vm1433, %v1430, 0
      %v1525 = vsel %vm1433, %v1431, 0
      %v1528 = vsel %vm1433, %v1432, 0
      %1530 = vmatprep.subr.mxu0 0.0
      %1531 = vmatpush1.msra.mxu0 0.0
      %1532 = vmatprep.subr.mxu0 0.0
      %1533 = vmatpush1.msra.mxu0 0.0
      %1534 = vmatprep.subr.mxu0 0.0
      %1535 = vmatpush1.msra.mxu0 0.0
      %1536 = vmatprep.subr.mxu0 0.0
      %1537 = vmatpush1.msra.mxu0 0.0
      %1538 = vmatprep.subr.mxu0 0.0
      %1539 = vmatpush1.msra.mxu0 0.0
      %1540 = vmatprep.subr.mxu0 0.0
      %1541 = vmatpush1.msra.mxu0 0.0
      %1542 = vmatprep.subr.mxu0 0.0
      %1543 = vmatpush1.msra.mxu0 0.0
      %1544 = vmatprep.subr.mxu0 0.0
      %1545 = vmatpush1.msra.mxu0 0.0
      %1546 = vmatprep.subr.mxu0 0.0
      %1547 = vmatpush1.msra.mxu0 0.0
      %1548 = vmatprep.subr.mxu0 0.0
      %1549 = vmatpush1.msra.mxu0 0.0
      %1550 = vmatprep.subr.mxu0 0.0
      %1551 = vmatpush1.msra.mxu0 0.0
      %1552 = vmatprep.subr.mxu0 0.0
      %1553 = vmatpush1.msra.mxu0 0.0
      %1554 = vmatprep.subr.mxu0 %v1347
      %1555 = vmatpush1.msra.mxu0 %v1346
      %1556 = vmatprep.subr.mxu0 %v1345
      %1557 = vmatpush1.msra.mxu0 %v1344
      %1558 = vmatprep.subr.mxu0 %v1343
      %1559 = vmatpush1.msra.mxu0 %v1342
      %1560 = vmatprep.subr.mxu0 %v1341
      %1561 = vmatpush1.msra.mxu0 %v1340
      %1562 = vmatprep.subr.mxu0 0.0
      %1563 = vmatpush2.msra.mxu0 0.0
      %1564 = vmatprep.subr.mxu0 0.0
      %1565 = vmatpush2.msra.mxu0 0.0
      %1566 = vmatprep.subr.mxu0 0.0
      %1567 = vmatpush2.msra.mxu0 0.0
      %1568 = vmatprep.subr.mxu0 0.0
      %1569 = vmatpush2.msra.mxu0 0.0
      %1570 = vmatprep.subr.mxu0 0.0
      %1571 = vmatpush2.msra.mxu0 0.0
      %1572 = vmatprep.subr.mxu0 0.0
      %1573 = vmatpush2.msra.mxu0 0.0
      %1574 = vmatprep.subr.mxu0 0.0
      %1575 = vmatpush2.msra.mxu0 0.0
      %1576 = vmatprep.subr.mxu0 0.0
      %1577 = vmatpush2.msra.mxu0 0.0
      %1578 = vmatprep.subr.mxu0 0.0
      %1579 = vmatpush2.msra.mxu0 0.0
      %1580 = vmatprep.subr.mxu0 0.0
      %1581 = vmatpush2.msra.mxu0 0.0
      %1582 = vmatprep.subr.mxu0 0.0
      %1583 = vmatpush2.msra.mxu0 0.0
      %1584 = vmatprep.subr.mxu0 0.0
      %1585 = vmatpush2.msra.mxu0 0.0
      %1586 = vmatprep.subr.mxu0 0.0
      %1587 = vmatpush2.msra.mxu0 0.0
      %1588 = vmatprep.subr.mxu0 0.0
      %1589 = vmatpush2.msra.mxu0 0.0
      %1590 = vmatprep.subr.mxu0 0.0
      %1591 = vmatpush2.msra.mxu0 0.0
      %1592 = vmatprep.subr.mxu0 0.0
      %1593 = vmatpush2.msra.mxu0 0.0
      %1594 = vmatprep.mubr.f32.mxu0 0.0
      %1595 = vmatmul.mubr.f32.gmra.mxu0 %v1435
      %v1596 = vpop.f32.mrf.mxu0
      %v1597 = vadd.f32 0.0, %v1596
      %v1598 = vpop.f32.mrf.mxu0
      %v1599 = vadd.f32 0.0, %v1598
      %1600 = vmatprep.mubr.f32.mxu0 0.0
      %1601 = vmatmul.mubr.f32.gmra.mxu0 %v1438
      %v1602 = vpop.f32.mrf.mxu0
      %v1603 = vadd.f32 0.0, %v1602
      %v1604 = vpop.f32.mrf.mxu0
      %v1605 = vadd.f32 0.0, %v1604
      %1606 = vmatprep.mubr.f32.mxu0 0.0
      %1607 = vmatmul.mubr.f32.gmra.mxu0 %v1441
      %v1608 = vpop.f32.mrf.mxu0
      %v1609 = vadd.f32 0.0, %v1608
      %v1610 = vpop.f32.mrf.mxu0
      %v1611 = vadd.f32 0.0, %v1610
      %1612 = vmatprep.mubr.f32.mxu0 0.0
      %1613 = vmatmul.mubr.f32.gmra.mxu0 %v1444
      %v1614 = vpop.f32.mrf.mxu0
      %v1615 = vadd.f32 0.0, %v1614
      %v1616 = vpop.f32.mrf.mxu0
      %v1617 = vadd.f32 0.0, %v1616
      %1618 = vmatprep.mubr.f32.mxu0 0.0
      %1619 = vmatmul.mubr.f32.gmra.mxu0 %v1447
      %v1620 = vpop.f32.mrf.mxu0
      %v1621 = vadd.f32 0.0, %v1620
      %v1622 = vpop.f32.mrf.mxu0
      %v1623 = vadd.f32 0.0, %v1622
      %1624 = vmatprep.mubr.f32.mxu0 0.0
      %1625 = vmatmul.mubr.f32.gmra.mxu0 %v1450
      %v1626 = vpop.f32.mrf.mxu0
      %v1627 = vadd.f32 0.0, %v1626
      %v1628 = vpop.f32.mrf.mxu0
      %v1629 = vadd.f32 0.0, %v1628
      %1630 = vmatprep.mubr.f32.mxu0 0.0
      %1631 = vmatmul.mubr.f32.gmra.mxu0 %v1453
      %v1632 = vpop.f32.mrf.mxu0
      %v1633 = vadd.f32 0.0, %v1632
      %v1634 = vpop.f32.mrf.mxu0
      %v1635 = vadd.f32 0.0, %v1634
      %1636 = vmatprep.mubr.f32.mxu0 0.0
      %1637 = vmatmul.mubr.f32.gmra.mxu0 %v1456
      %v1638 = vpop.f32.mrf.mxu0
      %v1639 = vadd.f32 0.0, %v1638
      %v1640 = vpop.f32.mrf.mxu0
      %v1641 = vadd.f32 0.0, %v1640
      %1642 = vmatprep.mubr.f32.mxu0 0.0
      %1643 = vmatmul.mubr.f32.gmra.mxu0 %v1459
      %v1644 = vpop.f32.mrf.mxu0
      %v1645 = vadd.f32 0.0, %v1644
      %v1646 = vpop.f32.mrf.mxu0
      %v1647 = vadd.f32 0.0, %v1646
      %1648 = vmatprep.mubr.f32.mxu0 0.0
      %1649 = vmatmul.mubr.f32.gmra.mxu0 %v1462
      %v1650 = vpop.f32.mrf.mxu0
      %v1651 = vadd.f32 0.0, %v1650
      %v1652 = vpop.f32.mrf.mxu0
      %v1653 = vadd.f32 0.0, %v1652
      %1654 = vmatprep.mubr.f32.mxu0 0.0
      %1655 = vmatmul.mubr.f32.gmra.mxu0 %v1465
      %v1656 = vpop.f32.mrf.mxu0
      %v1657 = vadd.f32 0.0, %v1656
      %v1658 = vpop.f32.mrf.mxu0
      %v1659 = vadd.f32 0.0, %v1658
      %1660 = vmatprep.mubr.f32.mxu0 0.0
      %1661 = vmatmul.mubr.f32.gmra.mxu0 %v1468
      %v1662 = vpop.f32.mrf.mxu0
      %v1663 = vadd.f32 0.0, %v1662
      %v1664 = vpop.f32.mrf.mxu0
      %v1665 = vadd.f32 0.0, %v1664
      %1666 = vmatprep.mubr.f32.mxu0 0.0
      %1667 = vmatmul.mubr.f32.gmra.mxu0 %v1471
      %v1668 = vpop.f32.mrf.mxu0
      %v1669 = vadd.f32 0.0, %v1668
      %v1670 = vpop.f32.mrf.mxu0
      %v1671 = vadd.f32 0.0, %v1670
      %1672 = vmatprep.mubr.f32.mxu0 0.0
      %1673 = vmatmul.mubr.f32.gmra.mxu0 %v1474
      %v1674 = vpop.f32.mrf.mxu0
      %v1675 = vadd.f32 0.0, %v1674
      %v1676 = vpop.f32.mrf.mxu0
      %v1677 = vadd.f32 0.0, %v1676
      %1678 = vmatprep.mubr.f32.mxu0 0.0
      %1679 = vmatmul.mubr.f32.gmra.mxu0 %v1477
      %v1680 = vpop.f32.mrf.mxu0
      %v1681 = vadd.f32 0.0, %v1680
      %v1682 = vpop.f32.mrf.mxu0
      %v1683 = vadd.f32 0.0, %v1682
      %1684 = vmatprep.mubr.f32.mxu0 0.0
      %1685 = vmatmul.mubr.f32.gmra.mxu0 %v1480
      %v1686 = vpop.f32.mrf.mxu0
      %v1687 = vadd.f32 0.0, %v1686
      %v1688 = vpop.f32.mrf.mxu0
      %v1689 = vadd.f32 0.0, %v1688
      %1690 = vmatprep.mubr.f32.mxu0 0.0
      %1691 = vmatmul.mubr.f32.gmra.mxu0 %v1483
      %v1692 = vpop.f32.mrf.mxu0
      %v1693 = vadd.f32 0.0, %v1692
      %v1694 = vpop.f32.mrf.mxu0
      %v1695 = vadd.f32 0.0, %v1694
      %1696 = vmatprep.mubr.f32.mxu0 0.0
      %1697 = vmatmul.mubr.f32.gmra.mxu0 %v1486
      %v1698 = vpop.f32.mrf.mxu0
      %v1699 = vadd.f32 0.0, %v1698
      %v1700 = vpop.f32.mrf.mxu0
      %v1701 = vadd.f32 0.0, %v1700
      %1702 = vmatprep.mubr.f32.mxu0 0.0
      %1703 = vmatmul.mubr.f32.gmra.mxu0 %v1489
      %v1704 = vpop.f32.mrf.mxu0
      %v1705 = vadd.f32 0.0, %v1704
      %v1706 = vpop.f32.mrf.mxu0
      %v1707 = vadd.f32 0.0, %v1706
      %1708 = vmatprep.mubr.f32.mxu0 0.0
      %1709 = vmatmul.mubr.f32.gmra.mxu0 %v1492
      %v1710 = vpop.f32.mrf.mxu0
      %v1711 = vadd.f32 0.0, %v1710
      %v1712 = vpop.f32.mrf.mxu0
      %v1713 = vadd.f32 0.0, %v1712
      %1714 = vmatprep.mubr.f32.mxu0 0.0
      %1715 = vmatmul.mubr.f32.gmra.mxu0 %v1495
      %v1716 = vpop.f32.mrf.mxu0
      %v1717 = vadd.f32 0.0, %v1716
      %v1718 = vpop.f32.mrf.mxu0
      %v1719 = vadd.f32 0.0, %v1718
      %1720 = vmatprep.mubr.f32.mxu0 0.0
      %1721 = vmatmul.mubr.f32.gmra.mxu0 %v1498
      %v1722 = vpop.f32.mrf.mxu0
      %v1723 = vadd.f32 0.0, %v1722
      %v1724 = vpop.f32.mrf.mxu0
      %v1725 = vadd.f32 0.0, %v1724
      %1726 = vmatprep.mubr.f32.mxu0 0.0
      %1727 = vmatmul.mubr.f32.gmra.mxu0 %v1501
      %v1728 = vpop.f32.mrf.mxu0
      %v1729 = vadd.f32 0.0, %v1728
      %v1730 = vpop.f32.mrf.mxu0
      %v1731 = vadd.f32 0.0, %v1730
      %1732 = vmatprep.mubr.f32.mxu0 0.0
      %1733 = vmatmul.mubr.f32.gmra.mxu0 %v1504
      %v1734 = vpop.f32.mrf.mxu0
      %v1735 = vadd.f32 0.0, %v1734
      %v1736 = vpop.f32.mrf.mxu0
      %v1737 = vadd.f32 0.0, %v1736
      %1738 = vmatprep.mubr.f32.mxu0 0.0
      %1739 = vmatmul.mubr.f32.gmra.mxu0 %v1507
      %v1740 = vpop.f32.mrf.mxu0
      %v1741 = vadd.f32 0.0, %v1740
      %v1742 = vpop.f32.mrf.mxu0
      %v1743 = vadd.f32 0.0, %v1742
      %1744 = vmatprep.mubr.f32.mxu0 0.0
      %1745 = vmatmul.mubr.f32.gmra.mxu0 %v1510
      %v1746 = vpop.f32.mrf.mxu0
      %v1747 = vadd.f32 0.0, %v1746
      %v1748 = vpop.f32.mrf.mxu0
      %v1749 = vadd.f32 0.0, %v1748
      %1750 = vmatprep.mubr.f32.mxu0 0.0
      %1751 = vmatmul.mubr.f32.gmra.mxu0 %v1513
      %v1752 = vpop.f32.mrf.mxu0
      %v1753 = vadd.f32 0.0, %v1752
      %v1754 = vpop.f32.mrf.mxu0
      %v1755 = vadd.f32 0.0, %v1754
      %1756 = vmatprep.mubr.f32.mxu0 0.0
      %1757 = vmatmul.mubr.f32.gmra.mxu0 %v1516
      %v1758 = vpop.f32.mrf.mxu0
      %v1759 = vadd.f32 0.0, %v1758
      %v1760 = vpop.f32.mrf.mxu0
      %v1761 = vadd.f32 0.0, %v1760
      %1762 = vmatprep.mubr.f32.mxu0 0.0
      %1763 = vmatmul.mubr.f32.gmra.mxu0 %v1519
      %v1764 = vpop.f32.mrf.mxu0
      %v1765 = vadd.f32 0.0, %v1764
      %v1766 = vpop.f32.mrf.mxu0
      %v1767 = vadd.f32 0.0, %v1766
      %1768 = vmatprep.mubr.f32.mxu0 0.0
      %1769 = vmatmul.mubr.f32.gmra.mxu0 %v1522
      %v1770 = vpop.f32.mrf.mxu0
      %v1771 = vadd.f32 0.0, %v1770
      %v1772 = vpop.f32.mrf.mxu0
      %v1773 = vadd.f32 0.0, %v1772
      %1774 = vmatprep.mubr.f32.mxu0 0.0
      %1775 = vmatmul.mubr.f32.gmra.mxu0 %v1525
      %v1776 = vpop.f32.mrf.mxu0
      %v1777 = vadd.f32 0.0, %v1776
      %v1778 = vpop.f32.mrf.mxu0
      %v1779 = vadd.f32 0.0, %v1778
      %1780 = vmatprep.mubr.f32.mxu0 0.0
      %1781 = vmatmul.mubr.f32.gmra.mxu0 %v1528
      %v1782 = vpop.f32.mrf.mxu0
      %v1783 = vadd.f32 0.0, %v1782
      %v1784 = vpop.f32.mrf.mxu0
      %v1785 = vadd.f32 0.0, %v1784
      %1786 = vdwg.mxu0
      %v1787 = vmax.f32 %v1597, %v1599
      %1788 = vmax.xlane.f32.xlu0 %v1787
      %v1789 = vpop.xlane.xlu0 %1788
      %v1790 = vmax.f32 %v1603, %v1605
      %1791 = vmax.xlane.f32.xlu0 %v1790
      %v1792 = vpop.xlane.xlu0 %1791
      %v1793 = vmax.f32 %v1609, %v1611
      %1794 = vmax.xlane.f32.xlu0 %v1793
      %v1795 = vpop.xlane.xlu0 %1794
      %v1796 = vmax.f32 %v1615, %v1617
      %1797 = vmax.xlane.f32.xlu0 %v1796
      %v1798 = vpop.xlane.xlu0 %1797
      %v1799 = vmax.f32 %v1621, %v1623
      %1800 = vmax.xlane.f32.xlu0 %v1799
      %v1801 = vpop.xlane.xlu0 %1800
      %v1802 = vmax.f32 %v1627, %v1629
      %1803 = vmax.xlane.f32.xlu0 %v1802
      %v1804 = vpop.xlane.xlu0 %1803
      %v1805 = vmax.f32 %v1633, %v1635
      %1806 = vmax.xlane.f32.xlu0 %v1805
      %v1807 = vpop.xlane.xlu0 %1806
      %v1808 = vmax.f32 %v1639, %v1641
      %1809 = vmax.xlane.f32.xlu0 %v1808
      %v1810 = vpop.xlane.xlu0 %1809
      %v1811 = vmax.f32 %v1645, %v1647
      %1812 = vmax.xlane.f32.xlu0 %v1811
      %v1813 = vpop.xlane.xlu0 %1812
      %v1814 = vmax.f32 %v1651, %v1653
      %1815 = vmax.xlane.f32.xlu0 %v1814
      %v1816 = vpop.xlane.xlu0 %1815
      %v1817 = vmax.f32 %v1657, %v1659
      %1818 = vmax.xlane.f32.xlu0 %v1817
      %v1819 = vpop.xlane.xlu0 %1818
      %v1820 = vmax.f32 %v1663, %v1665
      %1821 = vmax.xlane.f32.xlu0 %v1820
      %v1822 = vpop.xlane.xlu0 %1821
      %v1823 = vmax.f32 %v1669, %v1671
      %1824 = vmax.xlane.f32.xlu0 %v1823
      %v1825 = vpop.xlane.xlu0 %1824
      %v1826 = vmax.f32 %v1675, %v1677
      %1827 = vmax.xlane.f32.xlu0 %v1826
      %v1828 = vpop.xlane.xlu0 %1827
      %v1829 = vmax.f32 %v1681, %v1683
      %1830 = vmax.xlane.f32.xlu0 %v1829
      %v1831 = vpop.xlane.xlu0 %1830
      %v1832 = vmax.f32 %v1687, %v1689
      %1833 = vmax.xlane.f32.xlu0 %v1832
      %v1834 = vpop.xlane.xlu0 %1833
      %v1835 = vmax.f32 %v1693, %v1695
      %1836 = vmax.xlane.f32.xlu0 %v1835
      %v1837 = vpop.xlane.xlu0 %1836
      %v1838 = vmax.f32 %v1699, %v1701
      %1839 = vmax.xlane.f32.xlu0 %v1838
      %v1840 = vpop.xlane.xlu0 %1839
      %v1841 = vmax.f32 %v1705, %v1707
      %1842 = vmax.xlane.f32.xlu0 %v1841
      %v1843 = vpop.xlane.xlu0 %1842
      %v1844 = vmax.f32 %v1711, %v1713
      %1845 = vmax.xlane.f32.xlu0 %v1844
      %v1846 = vpop.xlane.xlu0 %1845
      %v1847 = vmax.f32 %v1717, %v1719
      %1848 = vmax.xlane.f32.xlu0 %v1847
      %v1849 = vpop.xlane.xlu0 %1848
      %v1850 = vmax.f32 %v1723, %v1725
      %1851 = vmax.xlane.f32.xlu0 %v1850
      %v1852 = vpop.xlane.xlu0 %1851
      %v1853 = vmax.f32 %v1729, %v1731
      %1854 = vmax.xlane.f32.xlu0 %v1853
      %v1855 = vpop.xlane.xlu0 %1854
      %v1856 = vmax.f32 %v1735, %v1737
      %1857 = vmax.xlane.f32.xlu0 %v1856
      %v1858 = vpop.xlane.xlu0 %1857
      %v1859 = vmax.f32 %v1741, %v1743
      %1860 = vmax.xlane.f32.xlu0 %v1859
      %v1861 = vpop.xlane.xlu0 %1860
      %v1862 = vmax.f32 %v1747, %v1749
      %1863 = vmax.xlane.f32.xlu0 %v1862
      %v1864 = vpop.xlane.xlu0 %1863
      %v1865 = vmax.f32 %v1753, %v1755
      %1866 = vmax.xlane.f32.xlu0 %v1865
      %v1867 = vpop.xlane.xlu0 %1866
      %v1868 = vmax.f32 %v1759, %v1761
      %1869 = vmax.xlane.f32.xlu0 %v1868
      %v1870 = vpop.xlane.xlu0 %1869
      %v1871 = vmax.f32 %v1765, %v1767
      %1872 = vmax.xlane.f32.xlu0 %v1871
      %v1873 = vpop.xlane.xlu0 %1872
      %v1874 = vmax.f32 %v1771, %v1773
      %1875 = vmax.xlane.f32.xlu0 %v1874
      %v1876 = vpop.xlane.xlu0 %1875
      %v1877 = vmax.f32 %v1777, %v1779
      %1878 = vmax.xlane.f32.xlu0 %v1877
      %v1879 = vpop.xlane.xlu0 %1878
      %v1880 = vmax.f32 %v1783, %v1785
      %1881 = vmax.xlane.f32.xlu0 %v1880
      %v1882 = vpop.xlane.xlu0 %1881
      %v1883 = vsub.f32 %v1597, %v1789
      %v1884 = vsub.f32 %v1599, %v1789
      %v1885 = vsub.f32 %v1603, %v1792
      %v1886 = vsub.f32 %v1605, %v1792
      %v1887 = vsub.f32 %v1609, %v1795
      %v1888 = vsub.f32 %v1611, %v1795
      %v1889 = vsub.f32 %v1615, %v1798
      %v1890 = vsub.f32 %v1617, %v1798
      %v1891 = vsub.f32 %v1621, %v1801
      %v1892 = vsub.f32 %v1623, %v1801
      %v1893 = vsub.f32 %v1627, %v1804
      %v1894 = vsub.f32 %v1629, %v1804
      %v1895 = vsub.f32 %v1633, %v1807
      %v1896 = vsub.f32 %v1635, %v1807
      %v1897 = vsub.f32 %v1639, %v1810
      %v1898 = vsub.f32 %v1641, %v1810
      %v1899 = vsub.f32 %v1645, %v1813
      %v1900 = vsub.f32 %v1647, %v1813
      %v1901 = vsub.f32 %v1651, %v1816
      %v1902 = vsub.f32 %v1653, %v1816
      %v1903 = vsub.f32 %v1657, %v1819
      %v1904 = vsub.f32 %v1659, %v1819
      %v1905 = vsub.f32 %v1663, %v1822
      %v1906 = vsub.f32 %v1665, %v1822
      %v1907 = vsub.f32 %v1669, %v1825
      %v1908 = vsub.f32 %v1671, %v1825
      %v1909 = vsub.f32 %v1675, %v1828
      %v1910 = vsub.f32 %v1677, %v1828
      %v1911 = vsub.f32 %v1681, %v1831
      %v1912 = vsub.f32 %v1683, %v1831
      %v1913 = vsub.f32 %v1687, %v1834
      %v1914 = vsub.f32 %v1689, %v1834
      %v1915 = vsub.f32 %v1693, %v1837
      %v1916 = vsub.f32 %v1695, %v1837
      %v1917 = vsub.f32 %v1699, %v1840
      %v1918 = vsub.f32 %v1701, %v1840
      %v1919 = vsub.f32 %v1705, %v1843
      %v1920 = vsub.f32 %v1707, %v1843
      %v1921 = vsub.f32 %v1711, %v1846
      %v1922 = vsub.f32 %v1713, %v1846
      %v1923 = vsub.f32 %v1717, %v1849
      %v1924 = vsub.f32 %v1719, %v1849
      %v1925 = vsub.f32 %v1723, %v1852
      %v1926 = vsub.f32 %v1725, %v1852
      %v1927 = vsub.f32 %v1729, %v1855
      %v1928 = vsub.f32 %v1731, %v1855
      %v1929 = vsub.f32 %v1735, %v1858
      %v1930 = vsub.f32 %v1737, %v1858
      %v1931 = vsub.f32 %v1741, %v1861
      %v1932 = vsub.f32 %v1743, %v1861
      %v1933 = vsub.f32 %v1747, %v1864
      %v1934 = vsub.f32 %v1749, %v1864
      %v1935 = vsub.f32 %v1753, %v1867
      %v1936 = vsub.f32 %v1755, %v1867
      %v1937 = vsub.f32 %v1759, %v1870
      %v1938 = vsub.f32 %v1761, %v1870
      %v1939 = vsub.f32 %v1765, %v1873
      %v1940 = vsub.f32 %v1767, %v1873
      %v1941 = vsub.f32 %v1771, %v1876
      %v1942 = vsub.f32 %v1773, %v1876
      %v1943 = vsub.f32 %v1777, %v1879
      %v1944 = vsub.f32 %v1779, %v1879
      %v1945 = vsub.f32 %v1783, %v1882
      %v1946 = vsub.f32 %v1785, %v1882
      %v1947 = vmul.f32 %v1883, 1.442695
      %v1948 = vpow.pop %v1947
      %v1949 = vmul.f32 %v1884, 1.442695
      %v1950 = vpow.pop %v1949
      %v1951 = vmul.f32 %v1885, 1.442695
      %v1952 = vpow.pop %v1951
      %v1953 = vmul.f32 %v1886, 1.442695
      %v1954 = vpow.pop %v1953
      %v1955 = vmul.f32 %v1887, 1.442695
      %v1956 = vpow.pop %v1955
      %v1957 = vmul.f32 %v1888, 1.442695
      %v1958 = vpow.pop %v1957
      %v1959 = vmul.f32 %v1889, 1.442695
      %v1960 = vpow.pop %v1959
      %v1961 = vmul.f32 %v1890, 1.442695
      %v1962 = vpow.pop %v1961
      %v1963 = vmul.f32 %v1891, 1.442695
      %v1964 = vpow.pop %v1963
      %v1965 = vmul.f32 %v1892, 1.442695
      %v1966 = vpow.pop %v1965
      %v1967 = vmul.f32 %v1893, 1.442695
      %v1968 = vpow.pop %v1967
      %v1969 = vmul.f32 %v1894, 1.442695
      %v1970 = vpow.pop %v1969
      %v1971 = vmul.f32 %v1895, 1.442695
      %v1972 = vpow.pop %v1971
      %v1973 = vmul.f32 %v1896, 1.442695
      %v1974 = vpow.pop %v1973
      %v1975 = vmul.f32 %v1897, 1.442695
      %v1976 = vpow.pop %v1975
      %v1977 = vmul.f32 %v1898, 1.442695
      %v1978 = vpow.pop %v1977
      %v1979 = vmul.f32 %v1899, 1.442695
      %v1980 = vpow.pop %v1979
      %v1981 = vmul.f32 %v1900, 1.442695
      %v1982 = vpow.pop %v1981
      %v1983 = vmul.f32 %v1901, 1.442695
      %v1984 = vpow.pop %v1983
      %v1985 = vmul.f32 %v1902, 1.442695
      %v1986 = vpow.pop %v1985
      %v1987 = vmul.f32 %v1903, 1.442695
      %v1988 = vpow.pop %v1987
      %v1989 = vmul.f32 %v1904, 1.442695
      %v1990 = vpow.pop %v1989
      %v1991 = vmul.f32 %v1905, 1.442695
      %v1992 = vpow.pop %v1991
      %v1993 = vmul.f32 %v1906, 1.442695
      %v1994 = vpow.pop %v1993
      %v1995 = vmul.f32 %v1907, 1.442695
      %v1996 = vpow.pop %v1995
      %v1997 = vmul.f32 %v1908, 1.442695
      %v1998 = vpow.pop %v1997
      %v1999 = vmul.f32 %v1909, 1.442695
      %v2000 = vpow.pop %v1999
      %v2001 = vmul.f32 %v1910, 1.442695
      %v2002 = vpow.pop %v2001
      %v2003 = vmul.f32 %v1911, 1.442695
      %v2004 = vpow.pop %v2003
      %v2005 = vmul.f32 %v1912, 1.442695
      %v2006 = vpow.pop %v2005
      %v2007 = vmul.f32 %v1913, 1.442695
      %v2008 = vpow.pop %v2007
      %v2009 = vmul.f32 %v1914, 1.442695
      %v2010 = vpow.pop %v2009
      %v2011 = vmul.f32 %v1915, 1.442695
      %v2012 = vpow.pop %v2011
      %v2013 = vmul.f32 %v1916, 1.442695
      %v2014 = vpow.pop %v2013
      %v2015 = vmul.f32 %v1917, 1.442695
      %v2016 = vpow.pop %v2015
      %v2017 = vmul.f32 %v1918, 1.442695
      %v2018 = vpow.pop %v2017
      %v2019 = vmul.f32 %v1919, 1.442695
      %v2020 = vpow.pop %v2019
      %v2021 = vmul.f32 %v1920, 1.442695
      %v2022 = vpow.pop %v2021
      %v2023 = vmul.f32 %v1921, 1.442695
      %v2024 = vpow.pop %v2023
      %v2025 = vmul.f32 %v1922, 1.442695
      %v2026 = vpow.pop %v2025
      %v2027 = vmul.f32 %v1923, 1.442695
      %v2028 = vpow.pop %v2027
      %v2029 = vmul.f32 %v1924, 1.442695
      %v2030 = vpow.pop %v2029
      %v2031 = vmul.f32 %v1925, 1.442695
      %v2032 = vpow.pop %v2031
      %v2033 = vmul.f32 %v1926, 1.442695
      %v2034 = vpow.pop %v2033
      %v2035 = vmul.f32 %v1927, 1.442695
      %v2036 = vpow.pop %v2035
      %v2037 = vmul.f32 %v1928, 1.442695
      %v2038 = vpow.pop %v2037
      %v2039 = vmul.f32 %v1929, 1.442695
      %v2040 = vpow.pop %v2039
      %v2041 = vmul.f32 %v1930, 1.442695
      %v2042 = vpow.pop %v2041
      %v2043 = vmul.f32 %v1931, 1.442695
      %v2044 = vpow.pop %v2043
      %v2045 = vmul.f32 %v1932, 1.442695
      %v2046 = vpow.pop %v2045
      %v2047 = vmul.f32 %v1933, 1.442695
      %v2048 = vpow.pop %v2047
      %v2049 = vmul.f32 %v1934, 1.442695
      %v2050 = vpow.pop %v2049
      %v2051 = vmul.f32 %v1935, 1.442695
      %v2052 = vpow.pop %v2051
      %v2053 = vmul.f32 %v1936, 1.442695
      %v2054 = vpow.pop %v2053
      %v2055 = vmul.f32 %v1937, 1.442695
      %v2056 = vpow.pop %v2055
      %v2057 = vmul.f32 %v1938, 1.442695
      %v2058 = vpow.pop %v2057
      %v2059 = vmul.f32 %v1939, 1.442695
      %v2060 = vpow.pop %v2059
      %v2061 = vmul.f32 %v1940, 1.442695
      %v2062 = vpow.pop %v2061
      %v2063 = vmul.f32 %v1941, 1.442695
      %v2064 = vpow.pop %v2063
      %v2065 = vmul.f32 %v1942, 1.442695
      %v2066 = vpow.pop %v2065
      %v2067 = vmul.f32 %v1943, 1.442695
      %v2068 = vpow.pop %v2067
      %v2069 = vmul.f32 %v1944, 1.442695
      %v2070 = vpow.pop %v2069
      %v2071 = vmul.f32 %v1945, 1.442695
      %v2072 = vpow.pop %v2071
      %v2073 = vmul.f32 %v1946, 1.442695
      %v2074 = vpow.pop %v2073
      %v2075 = vadd.f32 %v1948, %v1950
      %2076 = vadd.xlane.f32.xlu0 %v2075
      %v2077 = vpop.xlane.xlu0 %2076
      %v2078 = vadd.f32 %v1952, %v1954
      %2079 = vadd.xlane.f32.xlu0 %v2078
      %v2080 = vpop.xlane.xlu0 %2079
      %v2081 = vadd.f32 %v1956, %v1958
      %2082 = vadd.xlane.f32.xlu0 %v2081
      %v2083 = vpop.xlane.xlu0 %2082
      %v2084 = vadd.f32 %v1960, %v1962
      %2085 = vadd.xlane.f32.xlu0 %v2084
      %v2086 = vpop.xlane.xlu0 %2085
      %v2087 = vadd.f32 %v1964, %v1966
      %2088 = vadd.xlane.f32.xlu0 %v2087
      %v2089 = vpop.xlane.xlu0 %2088
      %v2090 = vadd.f32 %v1968, %v1970
      %2091 = vadd.xlane.f32.xlu0 %v2090
      %v2092 = vpop.xlane.xlu0 %2091
      %v2093 = vadd.f32 %v1972, %v1974
      %2094 = vadd.xlane.f32.xlu0 %v2093
      %v2095 = vpop.xlane.xlu0 %2094
      %v2096 = vadd.f32 %v1976, %v1978
      %2097 = vadd.xlane.f32.xlu0 %v2096
      %v2098 = vpop.xlane.xlu0 %2097
      %v2099 = vadd.f32 %v1980, %v1982
      %2100 = vadd.xlane.f32.xlu0 %v2099
      %v2101 = vpop.xlane.xlu0 %2100
      %v2102 = vadd.f32 %v1984, %v1986
      %2103 = vadd.xlane.f32.xlu0 %v2102
      %v2104 = vpop.xlane.xlu0 %2103
      %v2105 = vadd.f32 %v1988, %v1990
      %2106 = vadd.xlane.f32.xlu0 %v2105
      %v2107 = vpop.xlane.xlu0 %2106
      %v2108 = vadd.f32 %v1992, %v1994
      %2109 = vadd.xlane.f32.xlu0 %v2108
      %v2110 = vpop.xlane.xlu0 %2109
      %v2111 = vadd.f32 %v1996, %v1998
      %2112 = vadd.xlane.f32.xlu0 %v2111
      %v2113 = vpop.xlane.xlu0 %2112
      %v2114 = vadd.f32 %v2000, %v2002
      %2115 = vadd.xlane.f32.xlu0 %v2114
      %v2116 = vpop.xlane.xlu0 %2115
      %v2117 = vadd.f32 %v2004, %v2006
      %2118 = vadd.xlane.f32.xlu0 %v2117
      %v2119 = vpop.xlane.xlu0 %2118
      %v2120 = vadd.f32 %v2008, %v2010
      %2121 = vadd.xlane.f32.xlu0 %v2120
      %v2122 = vpop.xlane.xlu0 %2121
      %v2123 = vadd.f32 %v2012, %v2014
      %2124 = vadd.xlane.f32.xlu0 %v2123
      %v2125 = vpop.xlane.xlu0 %2124
      %v2126 = vadd.f32 %v2016, %v2018
      %2127 = vadd.xlane.f32.xlu0 %v2126
      %v2128 = vpop.xlane.xlu0 %2127
      %v2129 = vadd.f32 %v2020, %v2022
      %2130 = vadd.xlane.f32.xlu0 %v2129
      %v2131 = vpop.xlane.xlu0 %2130
      %v2132 = vadd.f32 %v2024, %v2026
      %2133 = vadd.xlane.f32.xlu0 %v2132
      %v2134 = vpop.xlane.xlu0 %2133
      %v2135 = vadd.f32 %v2028, %v2030
      %2136 = vadd.xlane.f32.xlu0 %v2135
      %v2137 = vpop.xlane.xlu0 %2136
      %v2138 = vadd.f32 %v2032, %v2034
      %2139 = vadd.xlane.f32.xlu0 %v2138
      %v2140 = vpop.xlane.xlu0 %2139
      %v2141 = vadd.f32 %v2036, %v2038
      %2142 = vadd.xlane.f32.xlu0 %v2141
      %v2143 = vpop.xlane.xlu0 %2142
      %v2144 = vadd.f32 %v2040, %v2042
      %2145 = vadd.xlane.f32.xlu0 %v2144
      %v2146 = vpop.xlane.xlu0 %2145
      %v2147 = vadd.f32 %v2044, %v2046
      %2148 = vadd.xlane.f32.xlu0 %v2147
      %v2149 = vpop.xlane.xlu0 %2148
      %v2150 = vadd.f32 %v2048, %v2050
      %2151 = vadd.xlane.f32.xlu0 %v2150
      %v2152 = vpop.xlane.xlu0 %2151
      %v2153 = vadd.f32 %v2052, %v2054
      %2154 = vadd.xlane.f32.xlu0 %v2153
      %v2155 = vpop.xlane.xlu0 %2154
      %v2156 = vadd.f32 %v2056, %v2058
      %2157 = vadd.xlane.f32.xlu0 %v2156
      %v2158 = vpop.xlane.xlu0 %2157
      %v2159 = vadd.f32 %v2060, %v2062
      %2160 = vadd.xlane.f32.xlu0 %v2159
      %v2161 = vpop.xlane.xlu0 %2160
      %v2162 = vadd.f32 %v2064, %v2066
      %2163 = vadd.xlane.f32.xlu0 %v2162
      %v2164 = vpop.xlane.xlu0 %2163
      %v2165 = vadd.f32 %v2068, %v2070
      %2166 = vadd.xlane.f32.xlu0 %v2165
      %v2167 = vpop.xlane.xlu0 %2166
      %v2168 = vadd.f32 %v2072, %v2074
      %2169 = vadd.xlane.f32.xlu0 %v2168
      %v2170 = vpop.xlane.xlu0 %2169
      %v2171 = vrcp.pop %v2077
      %v2172 = vrcp.pop %v2080
      %v2173 = vrcp.pop %v2083
      %v2174 = vrcp.pop %v2086
      %v2175 = vrcp.pop %v2089
      %v2176 = vrcp.pop %v2092
      %v2177 = vrcp.pop %v2095
      %v2178 = vrcp.pop %v2098
      %v2179 = vrcp.pop %v2101
      %v2180 = vrcp.pop %v2104
      %v2181 = vrcp.pop %v2107
      %v2182 = vrcp.pop %v2110
      %v2183 = vrcp.pop %v2113
      %v2184 = vrcp.pop %v2116
      %v2185 = vrcp.pop %v2119
      %v2186 = vrcp.pop %v2122
      %v2187 = vrcp.pop %v2125
      %v2188 = vrcp.pop %v2128
      %v2189 = vrcp.pop %v2131
      %v2190 = vrcp.pop %v2134
      %v2191 = vrcp.pop %v2137
      %v2192 = vrcp.pop %v2140
      %v2193 = vrcp.pop %v2143
      %v2194 = vrcp.pop %v2146
      %v2195 = vrcp.pop %v2149
      %v2196 = vrcp.pop %v2152
      %v2197 = vrcp.pop %v2155
      %v2198 = vrcp.pop %v2158
      %v2199 = vrcp.pop %v2161
      %v2200 = vrcp.pop %v2164
      %v2201 = vrcp.pop %v2167
      %v2202 = vrcp.pop %v2170
      %v2203 = vmul.f32 %v1948, %v2171
      %v2204 = vmul.f32 %v1950, %v2171
      %v2205 = vmul.f32 %v1952, %v2172
      %v2206 = vmul.f32 %v1954, %v2172
      %v2207 = vmul.f32 %v1956, %v2173
      %v2208 = vmul.f32 %v1958, %v2173
      %v2209 = vmul.f32 %v1960, %v2174
      %v2210 = vmul.f32 %v1962, %v2174
      %v2211 = vmul.f32 %v1964, %v2175
      %v2212 = vmul.f32 %v1966, %v2175
      %v2213 = vmul.f32 %v1968, %v2176
      %v2214 = vmul.f32 %v1970, %v2176
      %v2215 = vmul.f32 %v1972, %v2177
      %v2216 = vmul.f32 %v1974, %v2177
      %v2217 = vmul.f32 %v1976, %v2178
      %v2218 = vmul.f32 %v1978, %v2178
      %v2219 = vmul.f32 %v1980, %v2179
      %v2220 = vmul.f32 %v1982, %v2179
      %v2221 = vmul.f32 %v1984, %v2180
      %v2222 = vmul.f32 %v1986, %v2180
      %v2223 = vmul.f32 %v1988, %v2181
      %v2224 = vmul.f32 %v1990, %v2181
      %v2225 = vmul.f32 %v1992, %v2182
      %v2226 = vmul.f32 %v1994, %v2182
      %v2227 = vmul.f32 %v1996, %v2183
      %v2228 = vmul.f32 %v1998, %v2183
      %v2229 = vmul.f32 %v2000, %v2184
      %v2230 = vmul.f32 %v2002, %v2184
      %v2231 = vmul.f32 %v2004, %v2185
      %v2232 = vmul.f32 %v2006, %v2185
      %v2233 = vmul.f32 %v2008, %v2186
      %v2234 = vmul.f32 %v2010, %v2186
      %v2235 = vmul.f32 %v2012, %v2187
      %v2236 = vmul.f32 %v2014, %v2187
      %v2237 = vmul.f32 %v2016, %v2188
      %v2238 = vmul.f32 %v2018, %v2188
      %v2239 = vmul.f32 %v2020, %v2189
      %v2240 = vmul.f32 %v2022, %v2189
      %v2241 = vmul.f32 %v2024, %v2190
      %v2242 = vmul.f32 %v2026, %v2190
      %v2243 = vmul.f32 %v2028, %v2191
      %v2244 = vmul.f32 %v2030, %v2191
      %v2245 = vmul.f32 %v2032, %v2192
      %v2246 = vmul.f32 %v2034, %v2192
      %v2247 = vmul.f32 %v2036, %v2193
      %v2248 = vmul.f32 %v2038, %v2193
      %v2249 = vmul.f32 %v2040, %v2194
      %v2250 = vmul.f32 %v2042, %v2194
      %v2251 = vmul.f32 %v2044, %v2195
      %v2252 = vmul.f32 %v2046, %v2195
      %v2253 = vmul.f32 %v2048, %v2196
      %v2254 = vmul.f32 %v2050, %v2196
      %v2255 = vmul.f32 %v2052, %v2197
      %v2256 = vmul.f32 %v2054, %v2197
      %v2257 = vmul.f32 %v2056, %v2198
      %v2258 = vmul.f32 %v2058, %v2198
      %v2259 = vmul.f32 %v2060, %v2199
      %v2260 = vmul.f32 %v2062, %v2199
      %v2261 = vmul.f32 %v2064, %v2200
      %v2262 = vmul.f32 %v2066, %v2200
      %v2263 = vmul.f32 %v2068, %v2201
      %v2264 = vmul.f32 %v2070, %v2201
      %v2265 = vmul.f32 %v2072, %v2202
      %v2266 = vmul.f32 %v2074, %v2202
      %v2267 = vld [vmem:[%s155] sm:$0xff]
      %v2268 = vld [vmem:[%s155 + $0x8] sm:$0xff]
      %v2269 = vld [vmem:[%s155 + $0x10] sm:$0xff]
      %v2270 = vld [vmem:[%s155 + $0x18] sm:$0xff]
      %v2271 = vld [vmem:[%s155 + $0x20] sm:$0xff]
      %v2272 = vld [vmem:[%s155 + $0x28] sm:$0xff]
      %v2273 = vld [vmem:[%s155 + $0x30] sm:$0xff]
      %v2274 = vld [vmem:[%s155 + $0x38] sm:$0xff]
      %2275 = vmatprep.subr.mxu0 %v2234
      %2276 = vmatpush1.msra.mxu0 %v2233
      %2277 = vmatprep.subr.mxu0 %v2232
      %2278 = vmatpush1.msra.mxu0 %v2231
      %2279 = vmatprep.subr.mxu0 %v2230
      %2280 = vmatpush1.msra.mxu0 %v2229
      %2281 = vmatprep.subr.mxu0 %v2228
      %2282 = vmatpush1.msra.mxu0 %v2227
      %2283 = vmatprep.subr.mxu0 %v2226
      %2284 = vmatpush1.msra.mxu0 %v2225
      %2285 = vmatprep.subr.mxu0 %v2224
      %2286 = vmatpush1.msra.mxu0 %v2223
      %2287 = vmatprep.subr.mxu0 %v2222
      %2288 = vmatpush1.msra.mxu0 %v2221
      %2289 = vmatprep.subr.mxu0 %v2220
      %2290 = vmatpush1.msra.mxu0 %v2219
      %2291 = vmatprep.subr.mxu0 %v2218
      %2292 = vmatpush1.msra.mxu0 %v2217
      %2293 = vmatprep.subr.mxu0 %v2216
      %2294 = vmatpush1.msra.mxu0 %v2215
      %2295 = vmatprep.subr.mxu0 %v2214
      %2296 = vmatpush1.msra.mxu0 %v2213
      %2297 = vmatprep.subr.mxu0 %v2212
      %2298 = vmatpush1.msra.mxu0 %v2211
      %2299 = vmatprep.subr.mxu0 %v2210
      %2300 = vmatpush1.msra.mxu0 %v2209
      %2301 = vmatprep.subr.mxu0 %v2208
      %2302 = vmatpush1.msra.mxu0 %v2207
      %2303 = vmatprep.subr.mxu0 %v2206
      %2304 = vmatpush1.msra.mxu0 %v2205
      %2305 = vmatprep.subr.mxu0 %v2204
      %2306 = vmatpush1.msra.mxu0 %v2203
      %2307 = vmatprep.subr.mxu0 %v2266
      %2308 = vmatpush2.msra.mxu0 %v2265
      %2309 = vmatprep.subr.mxu0 %v2264
      %2310 = vmatpush2.msra.mxu0 %v2263
      %2311 = vmatprep.subr.mxu0 %v2262
      %2312 = vmatpush2.msra.mxu0 %v2261
      %2313 = vmatprep.subr.mxu0 %v2260
      %2314 = vmatpush2.msra.mxu0 %v2259
      %2315 = vmatprep.subr.mxu0 %v2258
      %2316 = vmatpush2.msra.mxu0 %v2257
      %2317 = vmatprep.subr.mxu0 %v2256
      %2318 = vmatpush2.msra.mxu0 %v2255
      %2319 = vmatprep.subr.mxu0 %v2254
      %2320 = vmatpush2.msra.mxu0 %v2253
      %2321 = vmatprep.subr.mxu0 %v2252
      %2322 = vmatpush2.msra.mxu0 %v2251
      %2323 = vmatprep.subr.mxu0 %v2250
      %2324 = vmatpush2.msra.mxu0 %v2249
      %2325 = vmatprep.subr.mxu0 %v2248
      %2326 = vmatpush2.msra.mxu0 %v2247
      %2327 = vmatprep.subr.mxu0 %v2246
      %2328 = vmatpush2.msra.mxu0 %v2245
      %2329 = vmatprep.subr.mxu0 %v2244
      %2330 = vmatpush2.msra.mxu0 %v2243
      %2331 = vmatprep.subr.mxu0 %v2242
      %2332 = vmatpush2.msra.mxu0 %v2241
      %2333 = vmatprep.subr.mxu0 %v2240
      %2334 = vmatpush2.msra.mxu0 %v2239
      %2335 = vmatprep.subr.mxu0 %v2238
      %2336 = vmatpush2.msra.mxu0 %v2237
      %2337 = vmatprep.subr.mxu0 %v2236
      %2338 = vmatpush2.msra.mxu0 %v2235
      %2339 = vmatprep.mubr.f32.mxu0 %v1362
      %2340 = vmatmul.mubr.f32.gmra.mxu0 %v1361
      %v2341 = vpop.f32.mrf.mxu0
      %v2342 = vadd.f32 0.0, %v2341
      %v2343 = vpop.f32.mrf.mxu0
      %v2344 = vadd.f32 0.0, %v2343
      %2345 = vmatprep.mubr.f32.mxu0 %v1364
      %2346 = vmatmul.mubr.f32.gmra.mxu0 %v1363
      %v2347 = vpop.f32.mrf.mxu0
      %v2348 = vadd.f32 0.0, %v2347
      %v2349 = vpop.f32.mrf.mxu0
      %v2350 = vadd.f32 0.0, %v2349
      %2351 = vmatprep.mubr.f32.mxu0 %v1366
      %2352 = vmatmul.mubr.f32.gmra.mxu0 %v1365
      %v2353 = vpop.f32.mrf.mxu0
      %v2354 = vadd.f32 0.0, %v2353
      %v2355 = vpop.f32.mrf.mxu0
      %v2356 = vadd.f32 0.0, %v2355
      %2357 = vmatprep.mubr.f32.mxu0 %v1368
      %2358 = vmatmul.mubr.f32.gmra.mxu0 %v1367
      %v2359 = vpop.f32.mrf.mxu0
      %v2360 = vadd.f32 0.0, %v2359
      %v2361 = vpop.f32.mrf.mxu0
      %v2362 = vadd.f32 0.0, %v2361
      %2363 = vdwg.mxu0
      %v2364 = vadd.f32 %v2267, %v2342
      %v2365 = vadd.f32 %v2268, %v2344
      %v2366 = vadd.f32 %v2269, %v2348
      %v2367 = vadd.f32 %v2270, %v2350
      %v2368 = vadd.f32 %v2271, %v2354
      %v2369 = vadd.f32 %v2272, %v2356
      %v2370 = vadd.f32 %v2273, %v2360
      %v2371 = vadd.f32 %v2274, %v2362
      %2372 = vst [vmem:[%s155] sm:$0xff] %v2364
      %2373 = vst [vmem:[%s155 + $0x8] sm:$0xff] %v2365
      %2374 = vst [vmem:[%s155 + $0x10] sm:$0xff] %v2366
      %2375 = vst [vmem:[%s155 + $0x18] sm:$0xff] %v2367
      %2376 = vst [vmem:[%s155 + $0x20] sm:$0xff] %v2368
      %2377 = vst [vmem:[%s155 + $0x28] sm:$0xff] %v2369
      %2378 = vst [vmem:[%s155 + $0x30] sm:$0xff] %v2370
      %2379 = vst [vmem:[%s155 + $0x38] sm:$0xff] %v2371
      %p2380 = scmp.lt.s32.totalorder %s17, 1
      %s2381 = scalar_select %p2380, %s17, 1
      %s2382 = smul.addr %s2381, 8
      %s2383 = smul.addr %s2382, 8
      %s2384 = scalar_lea.vmem %s2, %s2383
      // Predicated region
      $region33: #{multihead_self_attention.1} parent=27 // pred_check
        %p2385 = pneg %p90
      $region34: #{multihead_self_attention.1} parent=27 // pred_check_branch
        %2387 = sbr.rel (%p2385) target = $region36
      $region35: #{multihead_self_attention.1} parent=27 // pred_region
        _
      $region36: #{multihead_self_attention.1} parent=27 // pred_fallthru
        _
    $region28: #{multihead_self_attention.1} parent=5 // pred_fallthru
      _
    %p2388 = scmp.le.s32.totalorder 2, %s8
    // Predicated region
    $region37: #{multihead_self_attention.1} parent=5 // pred_check
      %p2389 = pneg %p2388
    $region38: #{multihead_self_attention.1} parent=5 // pred_check_branch
      %2391 = sbr.rel (%p2389) target = $region40
    $region39: #{multihead_self_attention.1} parent=5 // pred_region
      %s2392 = ssub.s32 %s8, 2
      // Predicated region
      $region41: #{multihead_self_attention.1} parent=39 // pred_check
        %p2393 = pneg %p96
      $region42: #{multihead_self_attention.1} parent=39 // pred_check_branch
        %2395 = sbr.rel (%p2393) target = $region44
      $region43: #{multihead_self_attention.1} parent=39 // pred_region
        %p2396 = scmp.lt.s32.totalorder %s19, 1
        %s2397 = scalar_select %p2396, %s19, 1
        %s2398 = smul.addr %s2397, 8
        %s2399 = smul.addr %s2398, 8
        %s2400 = scalar_lea.vmem %s2, %s2399
      $region44: #{multihead_self_attention.1} parent=39 // pred_fallthru
        _
    $region40: #{multihead_self_attention.1} parent=5 // pred_fallthru
      _
  $region6: #{multihead_self_attention.1} parent=0 // loop_footer
    %s12 = sadd.s32 1, %s8
  $region7: #{multihead_self_attention.1} parent=0 // loop_footer_branch
    %7 = sbr.rel target = $region3
  $region8: #{multihead_self_attention.1} parent=0 // loop_exit
    _

</llo_original>
